<compile_context>
chip_gen: v5e
topology: v5e:2x2
jax: 0.10.0
libtpu: 0.0.40
codegen_flags: <defaults>
</compile_context>

<pallas_src>
import numpy as np
import jax
import jax.numpy as jnp
from jax.experimental import pallas as pl
from jax.experimental.pallas import tpu as pltpu


# ----------------------------------------------------------------------------
# Host-side (one-time) weight preprocessing.
# ----------------------------------------------------------------------------
def build_lenet_operands(params, n):
    """Convert PyTorch-layout weights into fused-kernel operands for batch n."""
    f32 = np.float32

    # conv1 (1->6, 3x3) as 3 per-ky Toeplitz blocks over 28-lane input rows:
    #   h1[y, x*6+co] = sum_ky x[y+ky, :] @ m1[ky]      (x = 0..25)
    w1 = np.asarray(params["conv1_w"], f32)                      # (6, 1, 3, 3) OIHW
    m1 = np.zeros((3, 28, 156), f32)
    for ky in range(3):
        for kx in range(3):
            for x in range(26):
                for co in range(6):
                    m1[ky, x + kx, x * 6 + co] = w1[co, 0, ky, kx]
    b1 = np.tile(np.asarray(params["conv1_b"], f32), 26).reshape(1, 156)

    # pool1 stride-2 row select over the batched (n*28-3)-row row-pair-max slab.
    s1 = np.zeros((n * 13, n * 28 - 3), f32)
    for i in range(n):
        for p in range(13):
            s1[i * 13 + p, i * 28 + 2 * p] = 1.0

    # conv2 (6->16, 3x3) Toeplitz blocks built over pool1's PRE-column-select
    # 150-lane layout (lane = x_conv1*6 + ci, pooled x <-> even x_conv1):
    # the pool1 column-select matrix is folded in here.
    w2 = np.asarray(params["conv2_w"], f32)                      # (16, 6, 3, 3)
    m2 = np.zeros((3, 150, 176), f32)
    for ky in range(3):
        for kx in range(3):
            for x2 in range(11):
                for ci in range(6):
                    for co in range(16):
                        m2[ky, 2 * (x2 + kx) * 6 + ci, x2 * 16 + co] = w2[co, ci, ky, kx]
    b2 = np.tile(np.asarray(params["conv2_b"], f32), 11).reshape(1, 176)

    # pool2 per-output-row selects (5), each picking conv2 row 2*yp of every
    # sample from the batched (n*13-3)-row row-pair-max slab.
    s2 = np.zeros((5, n, n * 13 - 3), f32)
    for yp in range(5):
        for i in range(n):
            s2[yp, i, i * 13 + 2 * yp] = 1.0

    # fc1 split into 5 per-pooled-row blocks over conv2's PRE-column-select
    # 160-lane layout; the pool2 column select AND the torch NCHW flatten
    # permutation (feature index co*25 + yp*5 + xp) are folded in.
    # Output dim padded to 128 lanes.
    fw1 = np.asarray(params["fc1_w"], f32)                       # (400, 120)
    w1b = np.zeros((5, 160, 128), f32)
    for yp in range(5):
        for xp in range(5):
            for co in range(16):
                w1b[yp, (2 * xp) * 16 + co, :120] = fw1[co * 25 + yp * 5 + xp, :]
    bf1 = np.zeros((1, 128), f32)
    bf1[0, :120] = np.asarray(params["fc1_b"], f32)

    wf2 = np.zeros((128, 128), f32)
    wf2[:120, :84] = np.asarray(params["fc2_w"], f32)
    bf2 = np.zeros((1, 128), f32)
    bf2[0, :84] = np.asarray(params["fc2_b"], f32)

    wf3 = np.zeros((128, 128), f32)
    wf3[:84, :10] = np.asarray(params["fc3_w"], f32)
    bf3 = np.zeros((1, 128), f32)
    bf3[0, :10] = np.asarray(params["fc3_b"], f32)

    bf = lambda a: jnp.asarray(a, jnp.bfloat16)   # MXU-native; 0/1 selects exact
    fp = lambda a: jnp.asarray(a, jnp.float32)
    return (bf(m1), fp(b1), bf(s1), bf(m2), fp(b2), bf(s2),
            bf(w1b), fp(bf1), bf(wf2), fp(bf2), bf(wf3), fp(bf3))


# ----------------------------------------------------------------------------
# Single fused kernel. Activation layout: rows = batch*height (M dim),
# lanes = width*channels (channel minor). All matmul inputs bf16, f32 accum.
# ----------------------------------------------------------------------------
def _lenet_kernel(x_ref, m1_ref, b1_ref, s1_ref, m2_ref, b2_ref, s2_ref,
                  w1b_ref, bf1_ref, wf2_ref, bf2_ref, wf3_ref, bf3_ref, o_ref):
    f32, bf16 = jnp.float32, jnp.bfloat16
    x = x_ref[...]                                   # (N*28, 28) bf16
    r1 = x.shape[0] - 2                              # N*28-2 conv1 rows (2 junk/sample)

    # ---- conv1 + ReLU: sum of 3 row-shifted MXU matmuls (no lane concat) ----
    h1 = jnp.dot(x[0:r1, :], m1_ref[0], preferred_element_type=f32)
    h1 = h1 + jnp.dot(x[1:r1 + 1, :], m1_ref[1], preferred_element_type=f32)
    h1 = h1 + jnp.dot(x[2:r1 + 2, :], m1_ref[2], preferred_element_type=f32)
    h1 = jnp.maximum(h1 + b1_ref[...], 0.0)          # (N*28-2, 156), lanes = x*6+co

    # ---- pool1: row-pair max + stride-2 row select (MXU), lane-pair max ----
    rm1 = jnp.maximum(h1[0:r1 - 1, :], h1[1:r1, :]).astype(bf16)   # (N*28-3, 156)
    p1r = jnp.dot(s1_ref[...], rm1, preferred_element_type=f32)    # (N*13, 156)
    p1 = jnp.maximum(p1r[:, 0:150], p1r[:, 6:156]).astype(bf16)    # (N*13, 150) pre-select

    # ---- conv2 + ReLU: pool1 column-select folded into m2; 3 shifted matmuls ----
    r2 = p1.shape[0] - 2                             # N*13-2
    h2 = jnp.dot(p1[0:r2, :], m2_ref[0], preferred_element_type=f32)
    h2 = h2 + jnp.dot(p1[1:r2 + 1, :], m2_ref[1], preferred_element_type=f32)
    h2 = h2 + jnp.dot(p1[2:r2 + 2, :], m2_ref[2], preferred_element_type=f32)
    h2 = jnp.maximum(h2 + b2_ref[...], 0.0)          # (N*13-2, 176), lanes = x2*16+co

    # ---- pool2 + flatten + fc1 fused: 5 per-row selects; column select and
    #      flatten permutation are pre-folded into the fc1 weight blocks ----
    rm2 = jnp.maximum(h2[0:r2 - 1, :], h2[1:r2, :]).astype(bf16)   # (N*13-3, 176)
    acc = None
    for yp in range(5):                              # static, 5 iterations
        py = jnp.dot(s2_ref[yp], rm2, preferred_element_type=f32)      # (N, 176)
        cy = jnp.maximum(py[:, 0:160], py[:, 16:176]).astype(bf16)     # (N, 160)
        g = jnp.dot(cy, w1b_ref[yp], preferred_element_type=f32)       # (N, 128)
        acc = g if acc is None else acc + g

    # ---- MLP head; fc dims zero-padded to 128 lanes; final store lane-dense ----
    z1 = jnp.maximum(acc + bf1_ref[...], 0.0).astype(bf16)
    z2 = jnp.maximum(jnp.dot(z1, wf2_ref[...], preferred_element_type=f32)
                     + bf2_ref[...], 0.0).astype(bf16)
    o_ref[...] = jnp.dot(z2, wf3_ref[...], preferred_element_type=f32) + bf3_ref[...]


def lenet_forward(x, ops):
    """x: (N, 1, 28, 28) float32; ops: output of build_lenet_operands(params, N)."""
    n = x.shape[0]
    xb = x.reshape(n * 28, 28).astype(jnp.bfloat16)  # batch folded into rows (M dim)
    vmem = pl.BlockSpec(memory_space=pltpu.MemorySpace.VMEM)
    out = pl.pallas_call(
        _lenet_kernel,
        out_shape=jax.ShapeDtypeStruct((n, 128), jnp.float32),   # lane-dense padded logits
        in_specs=[vmem] * (1 + len(ops)),
        out_specs=vmem,
    )(xb, *ops)
    return out[:, :10]


# ----------------------------------------------------------------------------
# Pure-JAX reference (for correctness) and synthetic PyTorch-style init.
# ----------------------------------------------------------------------------
def _maxpool2x2_ref(a):
    n, c, h, w = a.shape
    a = a[:, :, :(h // 2) * 2, :(w // 2) * 2]
    return a.reshape(n, c, h // 2, 2, w // 2, 2).max(axis=(3, 5))


def lenet_reference(x, params):
    a = jax.lax.conv_general_dilated(x, params["conv1_w"], (1, 1), "VALID",
                                     dimension_numbers=("NCHW", "OIHW", "NCHW"))
    a = jnp.maximum(a + params["conv1_b"][None, :, None, None], 0.0)
    a = _maxpool2x2_ref(a)
    a = jax.lax.conv_general_dilated(a, params["conv2_w"], (1, 1), "VALID",
                                     dimension_numbers=("NCHW", "OIHW", "NCHW"))
    a = jnp.maximum(a + params["conv2_b"][None, :, None, None], 0.0)
    a = _maxpool2x2_ref(a)
    f = a.reshape(a.shape[0], -1)                     # torch .view order (NCHW)
    z = jnp.maximum(f @ params["fc1_w"] + params["fc1_b"], 0.0)
    z = jnp.maximum(z @ params["fc2_w"] + params["fc2_b"], 0.0)
    return z @ params["fc3_w"] + params["fc3_b"]


def init_params(key):
    # Deterministic synthetic init (PyTorch-style U(-1/sqrt(fan_in), 1/sqrt(fan_in))).
    def u(k, shape, fan_in):
        bound = 1.0 / float(np.sqrt(fan_in))
        return jax.random.uniform(k, shape, jnp.float32, -bound, bound)

    ks = jax.random.split(key, 10)
    return {
        "conv1_w": u(ks[0], (6, 1, 3, 3), 1 * 9),
        "conv1_b": u(ks[1], (6,), 1 * 9),
        "conv2_w": u(ks[2], (16, 6, 3, 3), 6 * 9),
        "conv2_b": u(ks[3], (16,), 6 * 9),
        # Linear weights stored as (in, out); forward computes x @ W + b.
        "fc1_w": u(ks[4], (400, 120), 400),
        "fc1_b": u(ks[5], (120,), 400),
        "fc2_w": u(ks[6], (120, 84), 120),
        "fc2_b": u(ks[7], (84,), 120),
        "fc3_w": u(ks[8], (84, 10), 84),
        "fc3_b": u(ks[9], (10,), 84),
    }


if __name__ == "__main__":
    key = jax.random.PRNGKey(0)
    pkey, xkey = jax.random.split(key)
    params = init_params(pkey)
    # 28x28 single-channel input is what fc1 = Linear(16*5*5, 120) implies.
    x = jax.random.normal(xkey, (2, 1, 28, 28), jnp.float32)

    ops = build_lenet_operands(params, x.shape[0])   # one-time host-side weight prep
    out = jax.block_until_ready(lenet_forward(x, ops))
    ref = jax.block_until_ready(lenet_reference(x, params))

    assert out.shape == (2, 10) and out.dtype == jnp.float32
    # bf16 matmul inputs (f32 accumulation) -> compare at a loose-but-safe tolerance.
    np.testing.assert_allclose(np.asarray(out), np.asarray(ref), rtol=5e-2, atol=5e-2)
    print("KERNEL_OK")
</pallas_src>

<mosaic_0001>
module attributes {stable_mosaic.version = 11 : i64} {
  func.func @_lenet_kernel(%arg0: memref<56x28xbf16, #tpu.memory_space<vmem>>, %arg1: memref<3x28x156xbf16, #tpu.memory_space<vmem>>, %arg2: memref<1x156xf32, #tpu.memory_space<vmem>>, %arg3: memref<26x53xbf16, #tpu.memory_space<vmem>>, %arg4: memref<3x150x176xbf16, #tpu.memory_space<vmem>>, %arg5: memref<1x176xf32, #tpu.memory_space<vmem>>, %arg6: memref<5x2x23xbf16, #tpu.memory_space<vmem>>, %arg7: memref<5x160x128xbf16, #tpu.memory_space<vmem>>, %arg8: memref<1x128xf32, #tpu.memory_space<vmem>>, %arg9: memref<128x128xbf16, #tpu.memory_space<vmem>>, %arg10: memref<1x128xf32, #tpu.memory_space<vmem>>, %arg11: memref<128x128xbf16, #tpu.memory_space<vmem>>, %arg12: memref<1x128xf32, #tpu.memory_space<vmem>>, %arg13: memref<2x128xf32, #tpu.memory_space<vmem>>) attributes {dimension_semantics = [], scalar_prefetch = 0 : i64, scratch_operands = 0 : i64, tpu.core_type = #tpu.core_type<tc>} {
    %c0 = arith.constant 0 : index
    %c0_0 = arith.constant 0 : index
    %0 = vector.load %arg0[%c0, %c0_0] : memref<56x28xbf16, #tpu.memory_space<vmem>>, vector<56x28xbf16>
    %1 = vector.extract_strided_slice %0 {offsets = [0, 0], sizes = [54, 28], strides = [1, 1]} : vector<56x28xbf16> to vector<54x28xbf16>
    %c0_1 = arith.constant 0 : index
    %c0_2 = arith.constant 0 : index
    %c0_3 = arith.constant 0 : index
    %2 = vector.load %arg1[%c0_1, %c0_2, %c0_3] : memref<3x28x156xbf16, #tpu.memory_space<vmem>>, vector<1x28x156xbf16>
    %3 = vector.shape_cast %2 : vector<1x28x156xbf16> to vector<28x156xbf16>
    %cst = arith.constant dense<0.000000e+00> : vector<54x156xf32>
    %4 = tpu.matmul %1, %3, %cst {dimension_numbers = #tpu.dot_dimension_numbers<[1], [0], [0], [1], [0, 0, 1, 1], [], []>} : vector<54x28xbf16>, vector<28x156xbf16>, vector<54x156xf32> -> vector<54x156xf32>
    %5 = vector.extract_strided_slice %0 {offsets = [1, 0], sizes = [54, 28], strides = [1, 1]} : vector<56x28xbf16> to vector<54x28xbf16>
    %c1 = arith.constant 1 : index
    %c0_4 = arith.constant 0 : index
    %c0_5 = arith.constant 0 : index
    %6 = vector.load %arg1[%c1, %c0_4, %c0_5] : memref<3x28x156xbf16, #tpu.memory_space<vmem>>, vector<1x28x156xbf16>
    %7 = vector.shape_cast %6 : vector<1x28x156xbf16> to vector<28x156xbf16>
    %cst_6 = arith.constant dense<0.000000e+00> : vector<54x156xf32>
    %8 = tpu.matmul %5, %7, %cst_6 {dimension_numbers = #tpu.dot_dimension_numbers<[1], [0], [0], [1], [0, 0, 1, 1], [], []>} : vector<54x28xbf16>, vector<28x156xbf16>, vector<54x156xf32> -> vector<54x156xf32>
    %9 = arith.addf %4, %8 : vector<54x156xf32>
    %10 = vector.extract_strided_slice %0 {offsets = [2, 0], sizes = [54, 28], strides = [1, 1]} : vector<56x28xbf16> to vector<54x28xbf16>
    %c2 = arith.constant 2 : index
    %c0_7 = arith.constant 0 : index
    %c0_8 = arith.constant 0 : index
    %11 = vector.load %arg1[%c2, %c0_7, %c0_8] : memref<3x28x156xbf16, #tpu.memory_space<vmem>>, vector<1x28x156xbf16>
    %12 = vector.shape_cast %11 : vector<1x28x156xbf16> to vector<28x156xbf16>
    %cst_9 = arith.constant dense<0.000000e+00> : vector<54x156xf32>
    %13 = tpu.matmul %10, %12, %cst_9 {dimension_numbers = #tpu.dot_dimension_numbers<[1], [0], [0], [1], [0, 0, 1, 1], [], []>} : vector<54x28xbf16>, vector<28x156xbf16>, vector<54x156xf32> -> vector<54x156xf32>
    %14 = arith.addf %9, %13 : vector<54x156xf32>
    %c0_10 = arith.constant 0 : index
    %c0_11 = arith.constant 0 : index
    %15 = vector.load %arg2[%c0_10, %c0_11] : memref<1x156xf32, #tpu.memory_space<vmem>>, vector<1x156xf32>
    %16 = vector.broadcast %15 : vector<1x156xf32> to vector<54x156xf32>
    %17 = arith.addf %14, %16 : vector<54x156xf32>
    %cst_12 = arith.constant 0.000000e+00 : f32
    %18 = vector.broadcast %cst_12 : f32 to vector<54x156xf32>
    %19 = arith.maximumf %17, %18 : vector<54x156xf32>
    %20 = vector.extract_strided_slice %19 {offsets = [0, 0], sizes = [53, 156], strides = [1, 1]} : vector<54x156xf32> to vector<53x156xf32>
    %21 = vector.extract_strided_slice %19 {offsets = [1, 0], sizes = [53, 156], strides = [1, 1]} : vector<54x156xf32> to vector<53x156xf32>
    %22 = arith.maximumf %20, %21 : vector<53x156xf32>
    %23 = arith.truncf %22 : vector<53x156xf32> to vector<53x156xbf16>
    %c0_13 = arith.constant 0 : index
    %c0_14 = arith.constant 0 : index
    %24 = vector.load %arg3[%c0_13, %c0_14] : memref<26x53xbf16, #tpu.memory_space<vmem>>, vector<26x53xbf16>
    %cst_15 = arith.constant dense<0.000000e+00> : vector<26x156xf32>
    %25 = tpu.matmul %24, %23, %cst_15 {dimension_numbers = #tpu.dot_dimension_numbers<[1], [0], [0], [1], [0, 0, 1, 1], [], []>} : vector<26x53xbf16>, vector<53x156xbf16>, vector<26x156xf32> -> vector<26x156xf32>
    %26 = vector.extract_strided_slice %25 {offsets = [0, 0], sizes = [26, 150], strides = [1, 1]} : vector<26x156xf32> to vector<26x150xf32>
    %27 = vector.extract_strided_slice %25 {offsets = [0, 6], sizes = [26, 150], strides = [1, 1]} : vector<26x156xf32> to vector<26x150xf32>
    %28 = arith.maximumf %26, %27 : vector<26x150xf32>
    %29 = arith.truncf %28 : vector<26x150xf32> to vector<26x150xbf16>
    %30 = vector.extract_strided_slice %29 {offsets = [0, 0], sizes = [24, 150], strides = [1, 1]} : vector<26x150xbf16> to vector<24x150xbf16>
    %c0_16 = arith.constant 0 : index
    %c0_17 = arith.constant 0 : index
    %c0_18 = arith.constant 0 : index
    %31 = vector.load %arg4[%c0_16, %c0_17, %c0_18] : memref<3x150x176xbf16, #tpu.memory_space<vmem>>, vector<1x150x176xbf16>
    %32 = vector.shape_cast %31 : vector<1x150x176xbf16> to vector<150x176xbf16>
    %cst_19 = arith.constant dense<0.000000e+00> : vector<24x176xf32>
    %33 = tpu.matmul %30, %32, %cst_19 {dimension_numbers = #tpu.dot_dimension_numbers<[1], [0], [0], [1], [0, 0, 1, 1], [], []>} : vector<24x150xbf16>, vector<150x176xbf16>, vector<24x176xf32> -> vector<24x176xf32>
    %34 = vector.extract_strided_slice %29 {offsets = [1, 0], sizes = [24, 150], strides = [1, 1]} : vector<26x150xbf16> to vector<24x150xbf16>
    %c1_20 = arith.constant 1 : index
    %c0_21 = arith.constant 0 : index
    %c0_22 = arith.constant 0 : index
    %35 = vector.load %arg4[%c1_20, %c0_21, %c0_22] : memref<3x150x176xbf16, #tpu.memory_space<vmem>>, vector<1x150x176xbf16>
    %36 = vector.shape_cast %35 : vector<1x150x176xbf16> to vector<150x176xbf16>
    %cst_23 = arith.constant dense<0.000000e+00> : vector<24x176xf32>
    %37 = tpu.matmul %34, %36, %cst_23 {dimension_numbers = #tpu.dot_dimension_numbers<[1], [0], [0], [1], [0, 0, 1, 1], [], []>} : vector<24x150xbf16>, vector<150x176xbf16>, vector<24x176xf32> -> vector<24x176xf32>
    %38 = arith.addf %33, %37 : vector<24x176xf32>
    %39 = vector.extract_strided_slice %29 {offsets = [2, 0], sizes = [24, 150], strides = [1, 1]} : vector<26x150xbf16> to vector<24x150xbf16>
    %c2_24 = arith.constant 2 : index
    %c0_25 = arith.constant 0 : index
    %c0_26 = arith.constant 0 : index
    %40 = vector.load %arg4[%c2_24, %c0_25, %c0_26] : memref<3x150x176xbf16, #tpu.memory_space<vmem>>, vector<1x150x176xbf16>
    %41 = vector.shape_cast %40 : vector<1x150x176xbf16> to vector<150x176xbf16>
    %cst_27 = arith.constant dense<0.000000e+00> : vector<24x176xf32>
    %42 = tpu.matmul %39, %41, %cst_27 {dimension_numbers = #tpu.dot_dimension_numbers<[1], [0], [0], [1], [0, 0, 1, 1], [], []>} : vector<24x150xbf16>, vector<150x176xbf16>, vector<24x176xf32> -> vector<24x176xf32>
    %43 = arith.addf %38, %42 : vector<24x176xf32>
    %c0_28 = arith.constant 0 : index
    %c0_29 = arith.constant 0 : index
    %44 = vector.load %arg5[%c0_28, %c0_29] : memref<1x176xf32, #tpu.memory_space<vmem>>, vector<1x176xf32>
    %45 = vector.broadcast %44 : vector<1x176xf32> to vector<24x176xf32>
    %46 = arith.addf %43, %45 : vector<24x176xf32>
    %cst_30 = arith.constant 0.000000e+00 : f32
    %47 = vector.broadcast %cst_30 : f32 to vector<24x176xf32>
    %48 = arith.maximumf %46, %47 : vector<24x176xf32>
    %49 = vector.extract_strided_slice %48 {offsets = [0, 0], sizes = [23, 176], strides = [1, 1]} : vector<24x176xf32> to vector<23x176xf32>
    %50 = vector.extract_strided_slice %48 {offsets = [1, 0], sizes = [23, 176], strides = [1, 1]} : vector<24x176xf32> to vector<23x176xf32>
    %51 = arith.maximumf %49, %50 : vector<23x176xf32>
    %52 = arith.truncf %51 : vector<23x176xf32> to vector<23x176xbf16>
    %c0_31 = arith.constant 0 : index
    %c0_32 = arith.constant 0 : index
    %c0_33 = arith.constant 0 : index
    %53 = vector.load %arg6[%c0_31, %c0_32, %c0_33] : memref<5x2x23xbf16, #tpu.memory_space<vmem>>, vector<1x2x23xbf16>
    %54 = vector.shape_cast %53 : vector<1x2x23xbf16> to vector<2x23xbf16>
    %cst_34 = arith.constant dense<0.000000e+00> : vector<2x176xf32>
    %55 = tpu.matmul %54, %52, %cst_34 {dimension_numbers = #tpu.dot_dimension_numbers<[1], [0], [0], [1], [0, 0, 1, 1], [], []>} : vector<2x23xbf16>, vector<23x176xbf16>, vector<2x176xf32> -> vector<2x176xf32>
    %56 = vector.extract_strided_slice %55 {offsets = [0, 0], sizes = [2, 160], strides = [1, 1]} : vector<2x176xf32> to vector<2x160xf32>
    %57 = vector.extract_strided_slice %55 {offsets = [0, 16], sizes = [2, 160], strides = [1, 1]} : vector<2x176xf32> to vector<2x160xf32>
    %58 = arith.maximumf %56, %57 : vector<2x160xf32>
    %59 = arith.truncf %58 : vector<2x160xf32> to vector<2x160xbf16>
    %c0_35 = arith.constant 0 : index
    %c0_36 = arith.constant 0 : index
    %c0_37 = arith.constant 0 : index
    %60 = vector.load %arg7[%c0_35, %c0_36, %c0_37] : memref<5x160x128xbf16, #tpu.memory_space<vmem>>, vector<1x160x128xbf16>
    %61 = vector.shape_cast %60 : vector<1x160x128xbf16> to vector<160x128xbf16>
    %cst_38 = arith.constant dense<0.000000e+00> : vector<2x128xf32>
    %62 = tpu.matmul %59, %61, %cst_38 {dimension_numbers = #tpu.dot_dimension_numbers<[1], [0], [0], [1], [0, 0, 1, 1], [], []>} : vector<2x160xbf16>, vector<160x128xbf16>, vector<2x128xf32> -> vector<2x128xf32>
    %c1_39 = arith.constant 1 : index
    %c0_40 = arith.constant 0 : index
    %c0_41 = arith.constant 0 : index
    %63 = vector.load %arg6[%c1_39, %c0_40, %c0_41] : memref<5x2x23xbf16, #tpu.memory_space<vmem>>, vector<1x2x23xbf16>
    %64 = vector.shape_cast %63 : vector<1x2x23xbf16> to vector<2x23xbf16>
    %cst_42 = arith.constant dense<0.000000e+00> : vector<2x176xf32>
    %65 = tpu.matmul %64, %52, %cst_42 {dimension_numbers = #tpu.dot_dimension_numbers<[1], [0], [0], [1], [0, 0, 1, 1], [], []>} : vector<2x23xbf16>, vector<23x176xbf16>, vector<2x176xf32> -> vector<2x176xf32>
    %66 = vector.extract_strided_slice %65 {offsets = [0, 0], sizes = [2, 160], strides = [1, 1]} : vector<2x176xf32> to vector<2x160xf32>
    %67 = vector.extract_strided_slice %65 {offsets = [0, 16], sizes = [2, 160], strides = [1, 1]} : vector<2x176xf32> to vector<2x160xf32>
    %68 = arith.maximumf %66, %67 : vector<2x160xf32>
    %69 = arith.truncf %68 : vector<2x160xf32> to vector<2x160xbf16>
    %c1_43 = arith.constant 1 : index
    %c0_44 = arith.constant 0 : index
    %c0_45 = arith.constant 0 : index
    %70 = vector.load %arg7[%c1_43, %c0_44, %c0_45] : memref<5x160x128xbf16, #tpu.memory_space<vmem>>, vector<1x160x128xbf16>
    %71 = vector.shape_cast %70 : vector<1x160x128xbf16> to vector<160x128xbf16>
    %cst_46 = arith.constant dense<0.000000e+00> : vector<2x128xf32>
    %72 = tpu.matmul %69, %71, %cst_46 {dimension_numbers = #tpu.dot_dimension_numbers<[1], [0], [0], [1], [0, 0, 1, 1], [], []>} : vector<2x160xbf16>, vector<160x128xbf16>, vector<2x128xf32> -> vector<2x128xf32>
    %73 = arith.addf %62, %72 : vector<2x128xf32>
    %c2_47 = arith.constant 2 : index
    %c0_48 = arith.constant 0 : index
    %c0_49 = arith.constant 0 : index
    %74 = vector.load %arg6[%c2_47, %c0_48, %c0_49] : memref<5x2x23xbf16, #tpu.memory_space<vmem>>, vector<1x2x23xbf16>
    %75 = vector.shape_cast %74 : vector<1x2x23xbf16> to vector<2x23xbf16>
    %cst_50 = arith.constant dense<0.000000e+00> : vector<2x176xf32>
    %76 = tpu.matmul %75, %52, %cst_50 {dimension_numbers = #tpu.dot_dimension_numbers<[1], [0], [0], [1], [0, 0, 1, 1], [], []>} : vector<2x23xbf16>, vector<23x176xbf16>, vector<2x176xf32> -> vector<2x176xf32>
    %77 = vector.extract_strided_slice %76 {offsets = [0, 0], sizes = [2, 160], strides = [1, 1]} : vector<2x176xf32> to vector<2x160xf32>
    %78 = vector.extract_strided_slice %76 {offsets = [0, 16], sizes = [2, 160], strides = [1, 1]} : vector<2x176xf32> to vector<2x160xf32>
    %79 = arith.maximumf %77, %78 : vector<2x160xf32>
    %80 = arith.truncf %79 : vector<2x160xf32> to vector<2x160xbf16>
    %c2_51 = arith.constant 2 : index
    %c0_52 = arith.constant 0 : index
    %c0_53 = arith.constant 0 : index
    %81 = vector.load %arg7[%c2_51, %c0_52, %c0_53] : memref<5x160x128xbf16, #tpu.memory_space<vmem>>, vector<1x160x128xbf16>
    %82 = vector.shape_cast %81 : vector<1x160x128xbf16> to vector<160x128xbf16>
    %cst_54 = arith.constant dense<0.000000e+00> : vector<2x128xf32>
    %83 = tpu.matmul %80, %82, %cst_54 {dimension_numbers = #tpu.dot_dimension_numbers<[1], [0], [0], [1], [0, 0, 1, 1], [], []>} : vector<2x160xbf16>, vector<160x128xbf16>, vector<2x128xf32> -> vector<2x128xf32>
    %84 = arith.addf %73, %83 : vector<2x128xf32>
    %c3 = arith.constant 3 : index
    %c0_55 = arith.constant 0 : index
    %c0_56 = arith.constant 0 : index
    %85 = vector.load %arg6[%c3, %c0_55, %c0_56] : memref<5x2x23xbf16, #tpu.memory_space<vmem>>, vector<1x2x23xbf16>
    %86 = vector.shape_cast %85 : vector<1x2x23xbf16> to vector<2x23xbf16>
    %cst_57 = arith.constant dense<0.000000e+00> : vector<2x176xf32>
    %87 = tpu.matmul %86, %52, %cst_57 {dimension_numbers = #tpu.dot_dimension_numbers<[1], [0], [0], [1], [0, 0, 1, 1], [], []>} : vector<2x23xbf16>, vector<23x176xbf16>, vector<2x176xf32> -> vector<2x176xf32>
    %88 = vector.extract_strided_slice %87 {offsets = [0, 0], sizes = [2, 160], strides = [1, 1]} : vector<2x176xf32> to vector<2x160xf32>
    %89 = vector.extract_strided_slice %87 {offsets = [0, 16], sizes = [2, 160], strides = [1, 1]} : vector<2x176xf32> to vector<2x160xf32>
    %90 = arith.maximumf %88, %89 : vector<2x160xf32>
    %91 = arith.truncf %90 : vector<2x160xf32> to vector<2x160xbf16>
    %c3_58 = arith.constant 3 : index
    %c0_59 = arith.constant 0 : index
    %c0_60 = arith.constant 0 : index
    %92 = vector.load %arg7[%c3_58, %c0_59, %c0_60] : memref<5x160x128xbf16, #tpu.memory_space<vmem>>, vector<1x160x128xbf16>
    %93 = vector.shape_cast %92 : vector<1x160x128xbf16> to vector<160x128xbf16>
    %cst_61 = arith.constant dense<0.000000e+00> : vector<2x128xf32>
    %94 = tpu.matmul %91, %93, %cst_61 {dimension_numbers = #tpu.dot_dimension_numbers<[1], [0], [0], [1], [0, 0, 1, 1], [], []>} : vector<2x160xbf16>, vector<160x128xbf16>, vector<2x128xf32> -> vector<2x128xf32>
    %95 = arith.addf %84, %94 : vector<2x128xf32>
    %c4 = arith.constant 4 : index
    %c0_62 = arith.constant 0 : index
    %c0_63 = arith.constant 0 : index
    %96 = vector.load %arg6[%c4, %c0_62, %c0_63] : memref<5x2x23xbf16, #tpu.memory_space<vmem>>, vector<1x2x23xbf16>
    %97 = vector.shape_cast %96 : vector<1x2x23xbf16> to vector<2x23xbf16>
    %cst_64 = arith.constant dense<0.000000e+00> : vector<2x176xf32>
    %98 = tpu.matmul %97, %52, %cst_64 {dimension_numbers = #tpu.dot_dimension_numbers<[1], [0], [0], [1], [0, 0, 1, 1], [], []>} : vector<2x23xbf16>, vector<23x176xbf16>, vector<2x176xf32> -> vector<2x176xf32>
    %99 = vector.extract_strided_slice %98 {offsets = [0, 0], sizes = [2, 160], strides = [1, 1]} : vector<2x176xf32> to vector<2x160xf32>
    %100 = vector.extract_strided_slice %98 {offsets = [0, 16], sizes = [2, 160], strides = [1, 1]} : vector<2x176xf32> to vector<2x160xf32>
    %101 = arith.maximumf %99, %100 : vector<2x160xf32>
    %102 = arith.truncf %101 : vector<2x160xf32> to vector<2x160xbf16>
    %c4_65 = arith.constant 4 : index
    %c0_66 = arith.constant 0 : index
    %c0_67 = arith.constant 0 : index
    %103 = vector.load %arg7[%c4_65, %c0_66, %c0_67] : memref<5x160x128xbf16, #tpu.memory_space<vmem>>, vector<1x160x128xbf16>
    %104 = vector.shape_cast %103 : vector<1x160x128xbf16> to vector<160x128xbf16>
    %cst_68 = arith.constant dense<0.000000e+00> : vector<2x128xf32>
    %105 = tpu.matmul %102, %104, %cst_68 {dimension_numbers = #tpu.dot_dimension_numbers<[1], [0], [0], [1], [0, 0, 1, 1], [], []>} : vector<2x160xbf16>, vector<160x128xbf16>, vector<2x128xf32> -> vector<2x128xf32>
    %106 = arith.addf %95, %105 : vector<2x128xf32>
    %c0_69 = arith.constant 0 : index
    %c0_70 = arith.constant 0 : index
    %107 = vector.load %arg8[%c0_69, %c0_70] : memref<1x128xf32, #tpu.memory_space<vmem>>, vector<1x128xf32>
    %108 = vector.broadcast %107 : vector<1x128xf32> to vector<2x128xf32>
    %109 = arith.addf %106, %108 : vector<2x128xf32>
    %cst_71 = arith.constant 0.000000e+00 : f32
    %110 = vector.broadcast %cst_71 : f32 to vector<2x128xf32>
    %111 = arith.maximumf %109, %110 : vector<2x128xf32>
    %112 = arith.truncf %111 : vector<2x128xf32> to vector<2x128xbf16>
    %c0_72 = arith.constant 0 : index
    %c0_73 = arith.constant 0 : index
    %113 = vector.load %arg9[%c0_72, %c0_73] : memref<128x128xbf16, #tpu.memory_space<vmem>>, vector<128x128xbf16>
    %cst_74 = arith.constant dense<0.000000e+00> : vector<2x128xf32>
    %114 = tpu.matmul %112, %113, %cst_74 {dimension_numbers = #tpu.dot_dimension_numbers<[1], [0], [0], [1], [0, 0, 1, 1], [], []>} : vector<2x128xbf16>, vector<128x128xbf16>, vector<2x128xf32> -> vector<2x128xf32>
    %c0_75 = arith.constant 0 : index
    %c0_76 = arith.constant 0 : index
    %115 = vector.load %arg10[%c0_75, %c0_76] : memref<1x128xf32, #tpu.memory_space<vmem>>, vector<1x128xf32>
    %116 = vector.broadcast %115 : vector<1x128xf32> to vector<2x128xf32>
    %117 = arith.addf %114, %116 : vector<2x128xf32>
    %cst_77 = arith.constant 0.000000e+00 : f32
    %118 = vector.broadcast %cst_77 : f32 to vector<2x128xf32>
    %119 = arith.maximumf %117, %118 : vector<2x128xf32>
    %120 = arith.truncf %119 : vector<2x128xf32> to vector<2x128xbf16>
    %c0_78 = arith.constant 0 : index
    %c0_79 = arith.constant 0 : index
    %121 = vector.load %arg11[%c0_78, %c0_79] : memref<128x128xbf16, #tpu.memory_space<vmem>>, vector<128x128xbf16>
    %cst_80 = arith.constant dense<0.000000e+00> : vector<2x128xf32>
    %122 = tpu.matmul %120, %121, %cst_80 {dimension_numbers = #tpu.dot_dimension_numbers<[1], [0], [0], [1], [0, 0, 1, 1], [], []>} : vector<2x128xbf16>, vector<128x128xbf16>, vector<2x128xf32> -> vector<2x128xf32>
    %c0_81 = arith.constant 0 : index
    %c0_82 = arith.constant 0 : index
    %123 = vector.load %arg12[%c0_81, %c0_82] : memref<1x128xf32, #tpu.memory_space<vmem>>, vector<1x128xf32>
    %124 = vector.broadcast %123 : vector<1x128xf32> to vector<2x128xf32>
    %125 = arith.addf %122, %124 : vector<2x128xf32>
    %c0_83 = arith.constant 0 : index
    %c0_84 = arith.constant 0 : index
    %126 = vector.load %arg13[%c0_83, %c0_84] : memref<2x128xf32, #tpu.memory_space<vmem>>, vector<2x128xf32>
    tpu.vector_store %arg13[%c0_83, %c0_84], %125 {strides = array<i32>} : memref<2x128xf32, #tpu.memory_space<vmem>>, vector<2x128xf32>,
    return
  }
}

</mosaic_0001>

<llo_original>
// kernel: tpu_custom_call.1
$region0: #{tpu_custom_call.1}
  #allocation0 [shape = 'u32[]', space=smem, size = 0x4, offset = 0x4, fixed_abs, tag = 'smem constant byte address 0x4 - core index']
  #allocation1 [shape = 'u32[72,128]{1,0:T(1,128)}', space=vmem, size = 0x9000, scoped, tag = 'internal scratch']
  %s0 = inlined_call_operand.vmem [shape: bf16[56,28], index: 0, kind: input, shape index: {}]
  %s1 = inlined_call_operand.hbm [shape: bf16[3,28,156], index: 1, kind: input, shape index: {}]
  %s2 = inlined_call_operand.vmem [shape: f32[1,156], index: 2, kind: input, shape index: {}]
  %s3 = inlined_call_operand.vmem [shape: bf16[26,53], index: 3, kind: input, shape index: {}]
  %s4 = inlined_call_operand.hbm [shape: bf16[3,150,176], index: 4, kind: input, shape index: {}]
  %s5 = inlined_call_operand.vmem [shape: f32[1,176], index: 5, kind: input, shape index: {}]
  %s6 = inlined_call_operand.vmem [shape: bf16[5,2,23], index: 6, kind: input, shape index: {}]
  %s7 = inlined_call_operand.hbm [shape: bf16[5,160,128], index: 7, kind: input, shape index: {}]
  %s8 = inlined_call_operand.vmem [shape: f32[1,128], index: 8, kind: input, shape index: {}]
  %s9 = inlined_call_operand.hbm [shape: bf16[128,128], index: 9, kind: input, shape index: {}]
  %s10 = inlined_call_operand.vmem [shape: f32[1,128], index: 10, kind: input, shape index: {}]
  %s11 = inlined_call_operand.hbm [shape: bf16[128,128], index: 11, kind: input, shape index: {}]
  %s12 = inlined_call_operand.vmem [shape: f32[1,128], index: 12, kind: input, shape index: {}]
  %s13 = inlined_call_operand.hbm [shape: f32[2,128], index: 13, kind: output, shape index: {}]
  %s14 = sld [smem:[#allocation0]]
  $region82: #{tpu_custom_call.1} parent=0
    _
  %s16 = ssub.s32 1, %s14
  %s17 = scalar_select 0, %s16, %s14
  $region1: #{tpu_custom_call.1} parent=0
    #allocation2 [shape = 'u8[49152]{0}', space=vmem, size = 0xc000, scoped, tag = 'input window, operand 1, single buffered']
    #allocation3 [shape = 's32[1]{0}', space=sflag, size = 0x4, scoped, tag = 'scoped memory for tpu_custom_call.1']
    #allocation4 [shape = 's32[1]{0}', space=sflag, size = 0x4, scoped, tag = 'scoped memory for tpu_custom_call.1']
    #allocation5 [shape = 'u8[233472]{0}', space=vmem, size = 0x39000, scoped, tag = 'input window, operand 4, single buffered']
    #allocation6 [shape = 's32[1]{0}', space=sflag, size = 0x4, scoped, tag = 'scoped memory for tpu_custom_call.1']
    #allocation7 [shape = 'u8[204800]{0}', space=vmem, size = 0x32000, scoped, tag = 'input window, operand 7, single buffered']
    #allocation8 [shape = 'u8[32768]{0}', space=vmem, size = 0x8000, scoped, tag = 'input window, operand 9, single buffered']
    #allocation9 [shape = 's32[1]{0}', space=sflag, size = 0x4, scoped, tag = 'scoped memory for tpu_custom_call.1']
    #allocation10 [shape = 'u8[32768]{0}', space=vmem, size = 0x8000, scoped, tag = 'input window, operand 11, single buffered']
    #allocation11 [shape = 'u8[1024]{0}', space=vmem, size = 0x400, scoped, tag = 'output window, operand 0, single buffered']
    %18 = vsyncpa [#allocation3], 0
    %19 = vsyncpa [#allocation6], 0
    %20 = vsyncpa [#allocation9], 0
    %21 = vsyncpa [#allocation4], 0
    // Predicated region
    $region2: #{tpu_custom_call.1} parent=1 // pred_check
      _
    $region3: #{tpu_custom_call.1} parent=1 // pred_check_branch
      %23 = sbr.rel (0) target = $region5
    $region4: #{tpu_custom_call.1} parent=1 // pred_region
      _
    $region5: #{tpu_custom_call.1} parent=1 // pred_fallthru
      _
    // Predicated region
    $region6: #{tpu_custom_call.1} parent=1 // pred_check
      _
    $region7: #{tpu_custom_call.1} parent=1 // pred_check_branch
      %25 = sbr.rel (0) target = $region9
    $region8: #{tpu_custom_call.1} parent=1 // pred_region
      %27 = vsyncadd [#allocation3], 0
      %s28 = sshll.u32 %s1, 4
      %s29 = int_to_ptr.hbm [resolvable:$true] %s28
      %s30 = sshll.u32 [#allocation2], 4
      %s31 = int_to_ptr.vmem [resolvable:$true] %s30
      %36 = dma.hbm_to_vmem [thread:$0]  %s29, 1536, %s31, [#allocation3], 128, 128, 8
    $region9: #{tpu_custom_call.1} parent=1 // pred_fallthru
      _
    // Predicated region
    $region10: #{tpu_custom_call.1} parent=1 // pred_check
      _
    $region11: #{tpu_custom_call.1} parent=1 // pred_check_branch
      %38 = sbr.rel (0) target = $region13
    $region12: #{tpu_custom_call.1} parent=1 // pred_region
      _
    $region13: #{tpu_custom_call.1} parent=1 // pred_fallthru
      _
    // Predicated region
    $region14: #{tpu_custom_call.1} parent=1 // pred_check
      _
    $region15: #{tpu_custom_call.1} parent=1 // pred_check_branch
      %40 = sbr.rel (0) target = $region17
    $region16: #{tpu_custom_call.1} parent=1 // pred_region
      _
    $region17: #{tpu_custom_call.1} parent=1 // pred_fallthru
      _
    // Predicated region
    $region18: #{tpu_custom_call.1} parent=1 // pred_check
      _
    $region19: #{tpu_custom_call.1} parent=1 // pred_check_branch
      %42 = sbr.rel (0) target = $region21
    $region20: #{tpu_custom_call.1} parent=1 // pred_region
      %44 = vsyncadd [#allocation6], 0
      %s45 = sshll.u32 %s4, 4
      %s46 = int_to_ptr.hbm [resolvable:$true] %s45
      %s47 = sshll.u32 [#allocation5], 4
      %s48 = int_to_ptr.vmem [resolvable:$true] %s47
      %53 = dma.hbm_to_vmem [thread:$0]  %s46, 7296, %s48, [#allocation6], 128, 128, 8
    $region21: #{tpu_custom_call.1} parent=1 // pred_fallthru
      _
    // Predicated region
    $region22: #{tpu_custom_call.1} parent=1 // pred_check
      _
    $region23: #{tpu_custom_call.1} parent=1 // pred_check_branch
      %55 = sbr.rel (0) target = $region25
    $region24: #{tpu_custom_call.1} parent=1 // pred_region
      _
    $region25: #{tpu_custom_call.1} parent=1 // pred_fallthru
      _
    // Predicated region
    $region26: #{tpu_custom_call.1} parent=1 // pred_check
      _
    $region27: #{tpu_custom_call.1} parent=1 // pred_check_branch
      %57 = sbr.rel (0) target = $region29
    $region28: #{tpu_custom_call.1} parent=1 // pred_region
      _
    $region29: #{tpu_custom_call.1} parent=1 // pred_fallthru
      _
    // Predicated region
    $region30: #{tpu_custom_call.1} parent=1 // pred_check
      _
    $region31: #{tpu_custom_call.1} parent=1 // pred_check_branch
      %59 = sbr.rel (0) target = $region33
    $region32: #{tpu_custom_call.1} parent=1 // pred_region
      %61 = vsyncadd [#allocation6], 0
      %s62 = sshll.u32 %s7, 4
      %s63 = int_to_ptr.hbm [resolvable:$true] %s62
      %s64 = sshll.u32 [#allocation7], 4
      %s65 = int_to_ptr.vmem [resolvable:$true] %s64
      %70 = dma.hbm_to_vmem [thread:$0]  %s63, 6400, %s65, [#allocation6], 64, 64, 4
    $region33: #{tpu_custom_call.1} parent=1 // pred_fallthru
      _
    // Predicated region
    $region34: #{tpu_custom_call.1} parent=1 // pred_check
      _
    $region35: #{tpu_custom_call.1} parent=1 // pred_check_branch
      %72 = sbr.rel (0) target = $region37
    $region36: #{tpu_custom_call.1} parent=1 // pred_region
      _
    $region37: #{tpu_custom_call.1} parent=1 // pred_fallthru
      _
    // Predicated region
    $region38: #{tpu_custom_call.1} parent=1 // pred_check
      _
    $region39: #{tpu_custom_call.1} parent=1 // pred_check_branch
      %74 = sbr.rel (0) target = $region41
    $region40: #{tpu_custom_call.1} parent=1 // pred_region
      %76 = vsyncadd [#allocation9], 0
      %s77 = sshll.u32 %s9, 4
      %s78 = int_to_ptr.hbm [resolvable:$true] %s77
      %s79 = sshll.u32 [#allocation8], 4
      %s80 = int_to_ptr.vmem [resolvable:$true] %s79
      %85 = dma.hbm_to_vmem [thread:$0]  %s78, 1024, %s80, [#allocation9], 64, 64, 4
    $region41: #{tpu_custom_call.1} parent=1 // pred_fallthru
      _
    // Predicated region
    $region42: #{tpu_custom_call.1} parent=1 // pred_check
      _
    $region43: #{tpu_custom_call.1} parent=1 // pred_check_branch
      %87 = sbr.rel (0) target = $region45
    $region44: #{tpu_custom_call.1} parent=1 // pred_region
      _
    $region45: #{tpu_custom_call.1} parent=1 // pred_fallthru
      _
    // Predicated region
    $region46: #{tpu_custom_call.1} parent=1 // pred_check
      _
    $region47: #{tpu_custom_call.1} parent=1 // pred_check_branch
      %89 = sbr.rel (0) target = $region49
    $region48: #{tpu_custom_call.1} parent=1 // pred_region
      %91 = vsyncadd [#allocation9], 0
      %s92 = sshll.u32 %s11, 4
      %s93 = int_to_ptr.hbm [resolvable:$true] %s92
      %s94 = sshll.u32 [#allocation10], 4
      %s95 = int_to_ptr.vmem [resolvable:$true] %s94
      %100 = dma.hbm_to_vmem [thread:$0]  %s93, 1024, %s95, [#allocation9], 64, 64, 4
    $region49: #{tpu_custom_call.1} parent=1 // pred_fallthru
      _
    // Predicated region
    $region50: #{tpu_custom_call.1} parent=1 // pred_check
      _
    $region51: #{tpu_custom_call.1} parent=1 // pred_check_branch
      %102 = sbr.rel (0) target = $region53
    $region52: #{tpu_custom_call.1} parent=1 // pred_region
      _
    $region53: #{tpu_custom_call.1} parent=1 // pred_fallthru
      _
    // Predicated region
    $region54: #{tpu_custom_call.1} parent=1 // pred_check
      _
    $region55: #{tpu_custom_call.1} parent=1 // pred_check_branch
      %104 = sbr.rel (0) target = $region57
    $region56: #{tpu_custom_call.1} parent=1 // pred_region
      %106 = dma.done [#allocation3], 1536
    $region57: #{tpu_custom_call.1} parent=1 // pred_fallthru
      _
    // Predicated region
    $region58: #{tpu_custom_call.1} parent=1 // pred_check
      _
    $region59: #{tpu_custom_call.1} parent=1 // pred_check_branch
      %108 = sbr.rel (0) target = $region61
    $region60: #{tpu_custom_call.1} parent=1 // pred_region
      %110 = dma.done [#allocation6], 7296
    $region61: #{tpu_custom_call.1} parent=1 // pred_fallthru
      _
    // Predicated region
    $region62: #{tpu_custom_call.1} parent=1 // pred_check
      _
    $region63: #{tpu_custom_call.1} parent=1 // pred_check_branch
      %112 = sbr.rel (0) target = $region65
    $region64: #{tpu_custom_call.1} parent=1 // pred_region
      %114 = dma.done [#allocation6], 6400
    $region65: #{tpu_custom_call.1} parent=1 // pred_fallthru
      _
    // Predicated region
    $region66: #{tpu_custom_call.1} parent=1 // pred_check
      _
    $region67: #{tpu_custom_call.1} parent=1 // pred_check_branch
      %116 = sbr.rel (0) target = $region69
    $region68: #{tpu_custom_call.1} parent=1 // pred_region
      %118 = dma.done [#allocation9], 1024
    $region69: #{tpu_custom_call.1} parent=1 // pred_fallthru
      _
    // Predicated region
    $region70: #{tpu_custom_call.1} parent=1 // pred_check
      _
    $region71: #{tpu_custom_call.1} parent=1 // pred_check_branch
      %120 = sbr.rel (0) target = $region73
    $region72: #{tpu_custom_call.1} parent=1 // pred_region
      %122 = dma.done [#allocation9], 1024
    $region73: #{tpu_custom_call.1} parent=1 // pred_fallthru
      _
    %v124 = vld [vmem:[%s0] sm:$0xf]
    %v125 = vld [vmem:[%s0 + $0x4] sm:$0xf]
    %v126 = vld [vmem:[%s0 + $0x8] sm:$0xf]
    %v127 = vld [vmem:[%s0 + $0xc] sm:$0xf]
    %v128 = vld [vmem:[%s0 + $0x10] sm:$0xf]
    %v129 = vld [vmem:[%s0 + $0x14] sm:$0xf]
    %v130 = vld [vmem:[%s0 + $0x18] sm:$0xf]
    %v131 = vld [vmem:[#allocation2] sm:$0xff]
    %v132 = vld [vmem:[#allocation2 + $0x8] sm:$0xff]
    %v133 = vld [vmem:[#allocation2 + $0x10] sm:$0xff]
    %v134 = vld [vmem:[#allocation2 + $0x18] sm:$0x33]
    %s135 = scalar_lea.vmem [#allocation2], 32
    %v136 = vld [vmem:[%s135] sm:$0xff]
    %v137 = vld [vmem:[%s135 + $0x8] sm:$0xff]
    %v138 = vld [vmem:[%s135 + $0x10] sm:$0xff]
    %v139 = vld [vmem:[%s135 + $0x18] sm:$0x33]
    %v147 = vunpack.c.l.b16 %v124
    %v148 = vunpack.c.l.b16 %v125
    %v149 = vunpack.c.l.b16 %v126
    %v150 = vunpack.c.l.b16 %v127
    %v151 = vunpack.c.l.b16 %v128
    %v152 = vunpack.c.l.b16 %v129
    %v153 = vunpack.c.l.b16 %v130
    %v154 = vpack.c.b16 %v148, %v147
    %v155 = vpack.c.b16 %v150, %v149
    %v156 = vpack.c.b16 %v152, %v151
    %v157 = vpack.c.b16 %v153, %v153
    %vm158 = vsmask.f32 7424
    %v160 = vshrl.u32 %v154, 16
    %v162 = vshll.u32 %v154, 16
    %v164 = vrot.slane %v162, 1
    %v165 = vor.u32 %v160, %v164
    %v167 = vshll.u32 %v155, 16
    %v169 = vrot.slane %v167, 1
    %v170 = vsel %vm158, %v165, %v169
    %v171 = vshrl.u32 %v155, 16
    %v173 = vor.u32 %v171, %v169
    %v175 = vshll.u32 %v156, 16
    %v177 = vrot.slane %v175, 1
    %v178 = vsel %vm158, %v173, %v177
    %v179 = vshrl.u32 %v156, 16
    %v181 = vor.u32 %v179, %v177
    %v183 = vshll.u32 %v157, 16
    %v185 = vrot.slane %v183, 1
    %v186 = vsel %vm158, %v181, %v185
    %v187 = vshrl.u32 %v157, 16
    %v189 = vor.u32 %v187, %v185
    %v194 = vunpack.c.l.b16 %v136
    %v195 = vunpack.c.h.b16 %v136
    %v196 = vunpack.c.l.b16 %v137
    %v197 = vunpack.c.h.b16 %v137
    %v198 = vunpack.c.l.b16 %v138
    %v199 = vunpack.c.h.b16 %v138
    %v200 = vunpack.c.l.b16 %v139
    %v201 = vunpack.c.h.b16 %v139
    %v202 = vpack.c.b16 %v196, %v194
    %v203 = vpack.c.b16 %v197, %v195
    %v204 = vpack.c.b16 %v200, %v198
    %v205 = vpack.c.b16 %v201, %v199
    %vm208 = vcmask 228352
    %v210 = vsel %vm208, %v170, 0
    %v213 = vsel %vm208, %v178, 0
    %v216 = vsel %vm208, %v186, 0
    %v219 = vsel %vm208, %v189, 0
    %vm221 = vcmask 1045504
    %v223 = vsel %vm221, %v204, 0
    %v226 = vsel %vm221, %v205, 0
    %228 = vmatpush.bf16.msra.mxu0 0
    %229 = vmatpush.bf16.msra.mxu0 0
    %230 = vmatpush.bf16.msra.mxu0 0
    %231 = vmatpush.bf16.msra.mxu0 0
    %232 = vmatpush.bf16.msra.mxu0 0
    %233 = vmatpush.bf16.msra.mxu0 0
    %234 = vmatpush.bf16.msra.mxu0 %v223
    %235 = vmatpush.bf16.msra.mxu0 %v202
    %236 = vmatmul.bf16.gmra.mxu0 %v210
    %v237 = vpop.f32.mrf.mxu0
    %v238 = vadd.f32 0.0, %v237
    %v239 = vpop.f32.mrf.mxu0
    %v240 = vadd.f32 0.0, %v239
    %241 = vmatmul.bf16.gmra.mxu0 %v213
    %v242 = vpop.f32.mrf.mxu0
    %v243 = vadd.f32 0.0, %v242
    %v244 = vpop.f32.mrf.mxu0
    %v245 = vadd.f32 0.0, %v244
    %246 = vmatmul.bf16.gmra.mxu0 %v216
    %v247 = vpop.f32.mrf.mxu0
    %v248 = vadd.f32 0.0, %v247
    %v249 = vpop.f32.mrf.mxu0
    %v250 = vadd.f32 0.0, %v249
    %251 = vmatmul.bf16.gmra.mxu0 %v219
    %v252 = vpop.f32.mrf.mxu0
    %v253 = vadd.f32 0.0, %v252
    %v254 = vpop.f32.mrf.mxu0
    %255 = vdwg.mxu0
    %256 = vmatpush.bf16.msra.mxu0 0
    %257 = vmatpush.bf16.msra.mxu0 0
    %258 = vmatpush.bf16.msra.mxu0 0
    %259 = vmatpush.bf16.msra.mxu0 0
    %260 = vmatpush.bf16.msra.mxu0 0
    %261 = vmatpush.bf16.msra.mxu0 0
    %262 = vmatpush.bf16.msra.mxu0 %v226
    %263 = vmatpush.bf16.msra.mxu0 %v203
    %264 = vmatmul.bf16.gmra.mxu0 %v210
    %v265 = vpop.f32.mrf.mxu0
    %v266 = vadd.f32 0.0, %v265
    %v267 = vpop.f32.mrf.mxu0
    %v268 = vadd.f32 0.0, %v267
    %269 = vmatmul.bf16.gmra.mxu0 %v213
    %v270 = vpop.f32.mrf.mxu0
    %v271 = vadd.f32 0.0, %v270
    %v272 = vpop.f32.mrf.mxu0
    %v273 = vadd.f32 0.0, %v272
    %274 = vmatmul.bf16.gmra.mxu0 %v216
    %v275 = vpop.f32.mrf.mxu0
    %v276 = vadd.f32 0.0, %v275
    %v277 = vpop.f32.mrf.mxu0
    %v278 = vadd.f32 0.0, %v277
    %279 = vmatmul.bf16.gmra.mxu0 %v219
    %v280 = vpop.f32.mrf.mxu0
    %v281 = vadd.f32 0.0, %v280
    %v282 = vpop.f32.mrf.mxu0
    %283 = vdwg.mxu0
    %v288 = vunpack.c.l.b16 %v131
    %v289 = vunpack.c.h.b16 %v131
    %v290 = vunpack.c.l.b16 %v132
    %v291 = vunpack.c.h.b16 %v132
    %v292 = vunpack.c.l.b16 %v133
    %v293 = vunpack.c.h.b16 %v133
    %v294 = vunpack.c.l.b16 %v134
    %v295 = vunpack.c.h.b16 %v134
    %v296 = vpack.c.b16 %v290, %v288
    %v297 = vpack.c.b16 %v291, %v289
    %v298 = vpack.c.b16 %v294, %v292
    %v299 = vpack.c.b16 %v295, %v293
    %v302 = vsel %vm208, %v154, 0
    %v304 = vsel %vm208, %v155, 0
    %v306 = vsel %vm208, %v156, 0
    %v308 = vsel %vm208, %v157, 0
    %v311 = vsel %vm221, %v298, 0
    %v314 = vsel %vm221, %v299, 0
    %316 = vmatpush.bf16.msra.mxu0 0
    %317 = vmatpush.bf16.msra.mxu0 0
    %318 = vmatpush.bf16.msra.mxu0 0
    %319 = vmatpush.bf16.msra.mxu0 0
    %320 = vmatpush.bf16.msra.mxu0 0
    %321 = vmatpush.bf16.msra.mxu0 0
    %322 = vmatpush.bf16.msra.mxu0 %v311
    %323 = vmatpush.bf16.msra.mxu0 %v296
    %324 = vmatmul.bf16.gmra.mxu0 %v302
    %v325 = vpop.f32.mrf.mxu0
    %v326 = vadd.f32 %v238, %v325
    %v327 = vpop.f32.mrf.mxu0
    %v328 = vadd.f32 %v240, %v327
    %329 = vmatmul.bf16.gmra.mxu0 %v304
    %v330 = vpop.f32.mrf.mxu0
    %v331 = vadd.f32 %v243, %v330
    %v332 = vpop.f32.mrf.mxu0
    %v333 = vadd.f32 %v245, %v332
    %334 = vmatmul.bf16.gmra.mxu0 %v306
    %v335 = vpop.f32.mrf.mxu0
    %v336 = vadd.f32 %v248, %v335
    %v337 = vpop.f32.mrf.mxu0
    %v338 = vadd.f32 %v250, %v337
    %339 = vmatmul.bf16.gmra.mxu0 %v308
    %v340 = vpop.f32.mrf.mxu0
    %v341 = vadd.f32 %v253, %v340
    %v342 = vpop.f32.mrf.mxu0
    %343 = vdwg.mxu0
    %344 = vmatpush.bf16.msra.mxu0 0
    %345 = vmatpush.bf16.msra.mxu0 0
    %346 = vmatpush.bf16.msra.mxu0 0
    %347 = vmatpush.bf16.msra.mxu0 0
    %348 = vmatpush.bf16.msra.mxu0 0
    %349 = vmatpush.bf16.msra.mxu0 0
    %350 = vmatpush.bf16.msra.mxu0 %v314
    %351 = vmatpush.bf16.msra.mxu0 %v297
    %352 = vmatmul.bf16.gmra.mxu0 %v302
    %v353 = vpop.f32.mrf.mxu0
    %v354 = vadd.f32 %v266, %v353
    %v355 = vpop.f32.mrf.mxu0
    %v356 = vadd.f32 %v268, %v355
    %357 = vmatmul.bf16.gmra.mxu0 %v304
    %v358 = vpop.f32.mrf.mxu0
    %v359 = vadd.f32 %v271, %v358
    %v360 = vpop.f32.mrf.mxu0
    %v361 = vadd.f32 %v273, %v360
    %362 = vmatmul.bf16.gmra.mxu0 %v306
    %v363 = vpop.f32.mrf.mxu0
    %v364 = vadd.f32 %v276, %v363
    %v365 = vpop.f32.mrf.mxu0
    %v366 = vadd.f32 %v278, %v365
    %367 = vmatmul.bf16.gmra.mxu0 %v308
    %v368 = vpop.f32.mrf.mxu0
    %v369 = vadd.f32 %v281, %v368
    %v370 = vpop.f32.mrf.mxu0
    %371 = vdwg.mxu0
    %s372 = scalar_lea.vmem [#allocation2], 64
    %v373 = vld [vmem:[%s372] sm:$0xff]
    %v374 = vld [vmem:[%s372 + $0x8] sm:$0xff]
    %v375 = vld [vmem:[%s372 + $0x10] sm:$0xff]
    %v376 = vld [vmem:[%s372 + $0x18] sm:$0x33]
    %vm377 = vcmask 1046528
    %v378 = vrot.slane %v154, 1
    %v379 = vrot.slane %v155, 1
    %v380 = vsel %vm377, %v378, %v379
    %v381 = vrot.slane %v156, 1
    %v382 = vsel %vm377, %v379, %v381
    %v383 = vrot.slane %v157, 1
    %v384 = vsel %vm377, %v381, %v383
    %v389 = vunpack.c.l.b16 %v373
    %v390 = vunpack.c.h.b16 %v373
    %v391 = vunpack.c.l.b16 %v374
    %v392 = vunpack.c.h.b16 %v374
    %v393 = vunpack.c.l.b16 %v375
    %v394 = vunpack.c.h.b16 %v375
    %v395 = vunpack.c.l.b16 %v376
    %v396 = vunpack.c.h.b16 %v376
    %v397 = vpack.c.b16 %v391, %v389
    %v398 = vpack.c.b16 %v392, %v390
    %v399 = vpack.c.b16 %v395, %v393
    %v400 = vpack.c.b16 %v396, %v394
    %v404 = vsel %vm208, %v380, 0
    %v407 = vsel %vm208, %v382, 0
    %v410 = vsel %vm208, %v384, 0
    %v413 = vsel %vm208, %v383, 0
    %v416 = vsel %vm221, %v399, 0
    %v419 = vsel %vm221, %v400, 0
    %421 = vmatpush.bf16.msra.mxu0 0
    %422 = vmatpush.bf16.msra.mxu0 0
    %423 = vmatpush.bf16.msra.mxu0 0
    %424 = vmatpush.bf16.msra.mxu0 0
    %425 = vmatpush.bf16.msra.mxu0 0
    %426 = vmatpush.bf16.msra.mxu0 0
    %427 = vmatpush.bf16.msra.mxu0 %v416
    %428 = vmatpush.bf16.msra.mxu0 %v397
    %429 = vmatmul.bf16.gmra.mxu0 %v404
    %v430 = vpop.f32.mrf.mxu0
    %v431 = vadd.f32 0.0, %v430
    %v432 = vpop.f32.mrf.mxu0
    %v433 = vadd.f32 0.0, %v432
    %434 = vmatmul.bf16.gmra.mxu0 %v407
    %v435 = vpop.f32.mrf.mxu0
    %v436 = vadd.f32 0.0, %v435
    %v437 = vpop.f32.mrf.mxu0
    %v438 = vadd.f32 0.0, %v437
    %439 = vmatmul.bf16.gmra.mxu0 %v410
    %v440 = vpop.f32.mrf.mxu0
    %v441 = vadd.f32 0.0, %v440
    %v442 = vpop.f32.mrf.mxu0
    %v443 = vadd.f32 0.0, %v442
    %444 = vmatmul.bf16.gmra.mxu0 %v413
    %v445 = vpop.f32.mrf.mxu0
    %v446 = vadd.f32 0.0, %v445
    %v447 = vpop.f32.mrf.mxu0
    %448 = vdwg.mxu0
    %449 = vmatpush.bf16.msra.mxu0 0
    %450 = vmatpush.bf16.msra.mxu0 0
    %451 = vmatpush.bf16.msra.mxu0 0
    %452 = vmatpush.bf16.msra.mxu0 0
    %453 = vmatpush.bf16.msra.mxu0 0
    %454 = vmatpush.bf16.msra.mxu0 0
    %455 = vmatpush.bf16.msra.mxu0 %v419
    %456 = vmatpush.bf16.msra.mxu0 %v398
    %457 = vmatmul.bf16.gmra.mxu0 %v404
    %v458 = vpop.f32.mrf.mxu0
    %v459 = vadd.f32 0.0, %v458
    %v460 = vpop.f32.mrf.mxu0
    %v461 = vadd.f32 0.0, %v460
    %462 = vmatmul.bf16.gmra.mxu0 %v407
    %v463 = vpop.f32.mrf.mxu0
    %v464 = vadd.f32 0.0, %v463
    %v465 = vpop.f32.mrf.mxu0
    %v466 = vadd.f32 0.0, %v465
    %467 = vmatmul.bf16.gmra.mxu0 %v410
    %v468 = vpop.f32.mrf.mxu0
    %v469 = vadd.f32 0.0, %v468
    %v470 = vpop.f32.mrf.mxu0
    %v471 = vadd.f32 0.0, %v470
    %472 = vmatmul.bf16.gmra.mxu0 %v413
    %v473 = vpop.f32.mrf.mxu0
    %v474 = vadd.f32 0.0, %v473
    %v475 = vpop.f32.mrf.mxu0
    %476 = vdwg.mxu0
    %v477 = vadd.f32 %v326, %v431
    %v478 = vadd.f32 %v354, %v459
    %v479 = vadd.f32 %v328, %v433
    %v480 = vadd.f32 %v356, %v461
    %v481 = vadd.f32 %v331, %v436
    %v482 = vadd.f32 %v359, %v464
    %v483 = vadd.f32 %v333, %v438
    %v484 = vadd.f32 %v361, %v466
    %v485 = vadd.f32 %v336, %v441
    %v486 = vadd.f32 %v364, %v469
    %v487 = vadd.f32 %v338, %v443
    %v488 = vadd.f32 %v366, %v471
    %v489 = vadd.f32 %v341, %v446
    %v490 = vadd.f32 %v369, %v474
    %v491 = vld [vmem:[%s2] sm:$0x3]
    %v493 = vperm.slane %v491, 0
    %v494 = vperm.slane %v491, 1
    %v497 = vadd.f32 %v477, %v493
    %v498 = vadd.f32 %v478, %v494
    %v499 = vadd.f32 %v479, %v493
    %v500 = vadd.f32 %v480, %v494
    %v501 = vadd.f32 %v481, %v493
    %v502 = vadd.f32 %v482, %v494
    %v503 = vadd.f32 %v483, %v493
    %v504 = vadd.f32 %v484, %v494
    %v505 = vadd.f32 %v485, %v493
    %v506 = vadd.f32 %v486, %v494
    %v507 = vadd.f32 %v487, %v493
    %v508 = vadd.f32 %v488, %v494
    %v509 = vadd.f32 %v489, %v493
    %v510 = vadd.f32 %v490, %v494
    %v511 = vmax.f32 %v497, 0.0
    %v512 = vmax.f32 %v498, 0.0
    %v513 = vmax.f32 %v499, 0.0
    %v514 = vmax.f32 %v500, 0.0
    %v515 = vmax.f32 %v501, 0.0
    %v516 = vmax.f32 %v502, 0.0
    %v517 = vmax.f32 %v503, 0.0
    %v518 = vmax.f32 %v504, 0.0
    %v519 = vmax.f32 %v505, 0.0
    %v520 = vmax.f32 %v506, 0.0
    %v521 = vmax.f32 %v507, 0.0
    %v522 = vmax.f32 %v508, 0.0
    %v523 = vmax.f32 %v509, 0.0
    %v524 = vmax.f32 %v510, 0.0
    %vm539 = vcmask 1046528
    %v540 = vrot.slane %v511, 1
    %v541 = vrot.slane %v513, 1
    %v542 = vsel %vm539, %v540, %v541
    %v543 = vrot.slane %v512, 1
    %v544 = vrot.slane %v514, 1
    %v545 = vsel %vm539, %v543, %v544
    %v546 = vrot.slane %v515, 1
    %v547 = vsel %vm539, %v541, %v546
    %v548 = vrot.slane %v516, 1
    %v549 = vsel %vm539, %v544, %v548
    %v550 = vrot.slane %v517, 1
    %v551 = vsel %vm539, %v546, %v550
    %v552 = vrot.slane %v518, 1
    %v553 = vsel %vm539, %v548, %v552
    %v554 = vrot.slane %v519, 1
    %v555 = vsel %vm539, %v550, %v554
    %v556 = vrot.slane %v520, 1
    %v557 = vsel %vm539, %v552, %v556
    %v558 = vrot.slane %v521, 1
    %v559 = vsel %vm539, %v554, %v558
    %v560 = vrot.slane %v522, 1
    %v561 = vsel %vm539, %v556, %v560
    %v562 = vrot.slane %v523, 1
    %v563 = vsel %vm539, %v558, %v562
    %v564 = vrot.slane %v524, 1
    %v565 = vsel %vm539, %v560, %v564
    %v580 = vmax.f32 %v511, %v542
    %v581 = vmax.f32 %v512, %v545
    %v582 = vmax.f32 %v513, %v547
    %v583 = vmax.f32 %v514, %v549
    %v584 = vmax.f32 %v515, %v551
    %v585 = vmax.f32 %v516, %v553
    %v586 = vmax.f32 %v517, %v555
    %v587 = vmax.f32 %v518, %v557
    %v588 = vmax.f32 %v519, %v559
    %v589 = vmax.f32 %v520, %v561
    %v590 = vmax.f32 %v521, %v563
    %v591 = vmax.f32 %v522, %v565
    %v592 = vmax.f32 %v523, %v562
    %v593 = vmax.f32 %v524, %v564
    %v594 = vpack.c.bf16 %v582, %v580
    %v595 = vpack.c.bf16 %v583, %v581
    %v596 = vpack.c.bf16 %v586, %v584
    %v597 = vpack.c.bf16 %v587, %v585
    %v598 = vpack.c.bf16 %v590, %v588
    %v599 = vpack.c.bf16 %v591, %v589
    %v600 = vpack.c.bf16 %v592, %v592
    %v601 = vpack.c.bf16 %v593, %v593
    %v602 = vld [vmem:[%s3] sm:$0xf]
    %v603 = vld [vmem:[%s3 + $0x4] sm:$0xf]
    %v604 = vld [vmem:[%s3 + $0x8] sm:$0xf]
    %v605 = vld [vmem:[%s3 + $0xc] sm:$0x1]
    %v610 = vunpack.c.l.b16 %v602
    %v611 = vunpack.c.l.b16 %v603
    %v612 = vunpack.c.l.b16 %v604
    %v613 = vunpack.c.l.b16 %v605
    %v614 = vpack.c.b16 %v611, %v610
    %v615 = vpack.c.b16 %v613, %v612
    %vm616 = vcmask 433152
    %v618 = vsel %vm616, %v614, 0
    %v621 = vsel %vm616, %v615, 0
    %vm623 = vcmask 1041408
    %vm624 = vcmask 1042432
    %v625 = vsel %vm623, 4294967295, 65535
    %v626 = vsel %vm624, %v625, 0
    %v628 = vand.u32 %v600, %v626
    %v631 = vand.u32 %v601, %v626
    %633 = vmatpush.bf16.msra.mxu0 0
    %634 = vmatpush.bf16.msra.mxu0 0
    %635 = vmatpush.bf16.msra.mxu0 0
    %636 = vmatpush.bf16.msra.mxu0 0
    %637 = vmatpush.bf16.msra.mxu0 %v628
    %638 = vmatpush.bf16.msra.mxu0 %v598
    %639 = vmatpush.bf16.msra.mxu0 %v596
    %640 = vmatpush.bf16.msra.mxu0 %v594
    %641 = vmatmul.bf16.gmra.mxu0 %v618
    %v642 = vpop.f32.mrf.mxu0
    %v643 = vadd.f32 0.0, %v642
    %v644 = vpop.f32.mrf.mxu0
    %v645 = vadd.f32 0.0, %v644
    %646 = vmatmul.bf16.gmra.mxu0 %v621
    %v647 = vpop.f32.mrf.mxu0
    %v648 = vadd.f32 0.0, %v647
    %v649 = vpop.f32.mrf.mxu0
    %v650 = vadd.f32 0.0, %v649
    %651 = vdwg.mxu0
    %652 = vmatpush.bf16.msra.mxu0 0
    %653 = vmatpush.bf16.msra.mxu0 0
    %654 = vmatpush.bf16.msra.mxu0 0
    %655 = vmatpush.bf16.msra.mxu0 0
    %656 = vmatpush.bf16.msra.mxu0 %v631
    %657 = vmatpush.bf16.msra.mxu0 %v599
    %658 = vmatpush.bf16.msra.mxu0 %v597
    %659 = vmatpush.bf16.msra.mxu0 %v595
    %660 = vmatmul.bf16.gmra.mxu0 %v618
    %v661 = vpop.f32.mrf.mxu0
    %v662 = vadd.f32 0.0, %v661
    %v663 = vpop.f32.mrf.mxu0
    %v664 = vadd.f32 0.0, %v663
    %665 = vmatmul.bf16.gmra.mxu0 %v621
    %v666 = vpop.f32.mrf.mxu0
    %v667 = vadd.f32 0.0, %v666
    %v668 = vpop.f32.mrf.mxu0
    %v669 = vadd.f32 0.0, %v668
    %670 = vdwg.mxu0
    %679 = vrot.lane.b32.xlu0 %v643, 122
    %v680 = vpop.permute.xlu0 %679
    %681 = vrot.lane.b32.xlu0 %v662, 122
    %v682 = vpop.permute.xlu0 %681
    %683 = vrot.lane.b32.xlu0 %v645, 122
    %v684 = vpop.permute.xlu0 %683
    %685 = vrot.lane.b32.xlu0 %v664, 122
    %v686 = vpop.permute.xlu0 %685
    %687 = vrot.lane.b32.xlu0 %v648, 122
    %v688 = vpop.permute.xlu0 %687
    %689 = vrot.lane.b32.xlu0 %v667, 122
    %v690 = vpop.permute.xlu0 %689
    %691 = vrot.lane.b32.xlu0 %v650, 122
    %v692 = vpop.permute.xlu0 %691
    %693 = vrot.lane.b32.xlu0 %v669, 122
    %v694 = vpop.permute.xlu0 %693
    %vm695 = vcmask 998400
    %v696 = vsel %vm695, %v680, %v682
    %v697 = vsel %vm695, %v684, %v686
    %v698 = vsel %vm695, %v688, %v690
    %v699 = vsel %vm695, %v692, %v694
    %v708 = vmax.f32 %v643, %v696
    %v709 = vmax.f32 %v662, %v682
    %v710 = vmax.f32 %v645, %v697
    %v711 = vmax.f32 %v664, %v686
    %v712 = vmax.f32 %v648, %v698
    %v713 = vmax.f32 %v667, %v690
    %v714 = vmax.f32 %v650, %v699
    %v715 = vmax.f32 %v669, %v694
    %v716 = vpack.c.bf16 %v709, %v708
    %v717 = vpack.c.bf16 %v711, %v710
    %v718 = vpack.c.bf16 %v713, %v712
    %v719 = vpack.c.bf16 %v715, %v714
    %v720 = vld [vmem:[#allocation5] sm:$0xff]
    %v721 = vld [vmem:[#allocation5 + $0x8] sm:$0xff]
    %v722 = vld [vmem:[#allocation5 + $0x10] sm:$0xff]
    %v723 = vld [vmem:[#allocation5 + $0x18] sm:$0xff]
    %v724 = vld [vmem:[#allocation5 + $0x20] sm:$0xff]
    %v725 = vld [vmem:[#allocation5 + $0x28] sm:$0xff]
    %v726 = vld [vmem:[#allocation5 + $0x30] sm:$0xff]
    %v727 = vld [vmem:[#allocation5 + $0x38] sm:$0xff]
    %v728 = vld [vmem:[#allocation5 + $0x40] sm:$0xff]
    %v729 = vld [vmem:[#allocation5 + $0x48] sm:$0xff]
    %v730 = vld [vmem:[#allocation5 + $0x50] sm:$0xff]
    %v731 = vld [vmem:[#allocation5 + $0x58] sm:$0xff]
    %v732 = vld [vmem:[#allocation5 + $0x60] sm:$0xff]
    %v733 = vld [vmem:[#allocation5 + $0x68] sm:$0xff]
    %v734 = vld [vmem:[#allocation5 + $0x70] sm:$0xff]
    %v735 = vld [vmem:[#allocation5 + $0x78] sm:$0xff]
    %v736 = vld [vmem:[#allocation5 + $0x80] sm:$0xff]
    %v737 = vld [vmem:[#allocation5 + $0x88] sm:$0xff]
    %v738 = vld [vmem:[#allocation5 + $0x90] sm:$0x77]
    %s739 = scalar_lea.vmem [#allocation5], 152
    %v740 = vld [vmem:[%s739] sm:$0xff]
    %v741 = vld [vmem:[%s739 + $0x8] sm:$0xff]
    %v742 = vld [vmem:[%s739 + $0x10] sm:$0xff]
    %v743 = vld [vmem:[%s739 + $0x18] sm:$0xff]
    %v744 = vld [vmem:[%s739 + $0x20] sm:$0xff]
    %v745 = vld [vmem:[%s739 + $0x28] sm:$0xff]
    %v746 = vld [vmem:[%s739 + $0x30] sm:$0xff]
    %v747 = vld [vmem:[%s739 + $0x38] sm:$0xff]
    %v748 = vld [vmem:[%s739 + $0x40] sm:$0xff]
    %v749 = vld [vmem:[%s739 + $0x48] sm:$0xff]
    %v750 = vld [vmem:[%s739 + $0x50] sm:$0xff]
    %v751 = vld [vmem:[%s739 + $0x58] sm:$0xff]
    %v752 = vld [vmem:[%s739 + $0x60] sm:$0xff]
    %v753 = vld [vmem:[%s739 + $0x68] sm:$0xff]
    %v754 = vld [vmem:[%s739 + $0x70] sm:$0xff]
    %v755 = vld [vmem:[%s739 + $0x78] sm:$0xff]
    %v756 = vld [vmem:[%s739 + $0x80] sm:$0xff]
    %v757 = vld [vmem:[%s739 + $0x88] sm:$0xff]
    %v758 = vld [vmem:[%s739 + $0x90] sm:$0x77]
    %v763 = vunpack.c.l.b16 %v716
    %v764 = vunpack.c.h.b16 %v716
    %v765 = vunpack.c.l.b16 %v717
    %v766 = vunpack.c.h.b16 %v717
    %v767 = vunpack.c.l.b16 %v718
    %v768 = vunpack.c.h.b16 %v718
    %v769 = vunpack.c.l.b16 %v719
    %v770 = vunpack.c.h.b16 %v719
    %v771 = vpack.c.b16 %v765, %v763
    %v772 = vpack.c.b16 %v766, %v764
    %v773 = vpack.c.b16 %v769, %v767
    %v774 = vpack.c.b16 %v770, %v768
    %v776 = vshrl.u32 %v771, 16
    %v778 = vshll.u32 %v771, 16
    %v780 = vrot.slane %v778, 1
    %v781 = vor.u32 %v776, %v780
    %v783 = vshll.u32 %v773, 16
    %v785 = vrot.slane %v783, 1
    %v786 = vsel %vm158, %v781, %v785
    %v788 = vshrl.u32 %v772, 16
    %v790 = vshll.u32 %v772, 16
    %v792 = vrot.slane %v790, 1
    %v793 = vor.u32 %v788, %v792
    %v795 = vshll.u32 %v774, 16
    %v797 = vrot.slane %v795, 1
    %v798 = vsel %vm158, %v793, %v797
    %v799 = vshrl.u32 %v773, 16
    %v801 = vor.u32 %v799, %v785
    %v802 = vshrl.u32 %v774, 16
    %v804 = vor.u32 %v802, %v797
    %v826 = vunpack.c.l.b16 %v740
    %v827 = vunpack.c.h.b16 %v740
    %v828 = vunpack.c.l.b16 %v741
    %v829 = vunpack.c.h.b16 %v741
    %v830 = vunpack.c.l.b16 %v742
    %v831 = vunpack.c.h.b16 %v742
    %v832 = vunpack.c.l.b16 %v743
    %v833 = vunpack.c.h.b16 %v743
    %v834 = vunpack.c.l.b16 %v744
    %v835 = vunpack.c.h.b16 %v744
    %v836 = vunpack.c.l.b16 %v745
    %v837 = vunpack.c.h.b16 %v745
    %v838 = vunpack.c.l.b16 %v746
    %v839 = vunpack.c.h.b16 %v746
    %v840 = vunpack.c.l.b16 %v747
    %v841 = vunpack.c.h.b16 %v747
    %v842 = vunpack.c.l.b16 %v748
    %v843 = vunpack.c.h.b16 %v748
    %v844 = vunpack.c.l.b16 %v749
    %v845 = vunpack.c.h.b16 %v749
    %v846 = vunpack.c.l.b16 %v750
    %v847 = vunpack.c.h.b16 %v750
    %v848 = vunpack.c.l.b16 %v751
    %v849 = vunpack.c.h.b16 %v751
    %v850 = vunpack.c.l.b16 %v752
    %v851 = vunpack.c.h.b16 %v752
    %v852 = vunpack.c.l.b16 %v753
    %v853 = vunpack.c.h.b16 %v753
    %v854 = vunpack.c.l.b16 %v754
    %v855 = vunpack.c.h.b16 %v754
    %v856 = vunpack.c.l.b16 %v755
    %v857 = vunpack.c.h.b16 %v755
    %v858 = vunpack.c.l.b16 %v756
    %v859 = vunpack.c.h.b16 %v756
    %v860 = vunpack.c.l.b16 %v757
    %v861 = vunpack.c.h.b16 %v757
    %v862 = vunpack.c.l.b16 %v758
    %v863 = vunpack.c.h.b16 %v758
    %v864 = vpack.c.b16 %v828, %v826
    %v865 = vpack.c.b16 %v829, %v827
    %v866 = vpack.c.b16 %v832, %v830
    %v867 = vpack.c.b16 %v833, %v831
    %v868 = vpack.c.b16 %v836, %v834
    %v869 = vpack.c.b16 %v837, %v835
    %v870 = vpack.c.b16 %v840, %v838
    %v871 = vpack.c.b16 %v841, %v839
    %v872 = vpack.c.b16 %v844, %v842
    %v873 = vpack.c.b16 %v845, %v843
    %v874 = vpack.c.b16 %v848, %v846
    %v875 = vpack.c.b16 %v849, %v847
    %v876 = vpack.c.b16 %v852, %v850
    %v877 = vpack.c.b16 %v853, %v851
    %v878 = vpack.c.b16 %v856, %v854
    %v879 = vpack.c.b16 %v857, %v855
    %v880 = vpack.c.b16 %v860, %v858
    %v881 = vpack.c.b16 %v861, %v859
    %v882 = vpack.c.b16 %v862, %v862
    %v883 = vpack.c.b16 %v863, %v863
    %vm902 = vcmask 179200
    %v904 = vsel %vm902, %v798, 0
    %v907 = vsel %vm902, %v804, 0
    %v910 = vsel %vm624, %v882, 0
    %v913 = vsel %vm624, %v883, 0
    %915 = vmatpush.bf16.msra.mxu0 %v878
    %916 = vmatpush.bf16.msra.mxu0 %v876
    %917 = vmatpush.bf16.msra.mxu0 %v874
    %918 = vmatpush.bf16.msra.mxu0 %v872
    %919 = vmatpush.bf16.msra.mxu0 %v870
    %920 = vmatpush.bf16.msra.mxu0 %v868
    %921 = vmatpush.bf16.msra.mxu0 %v866
    %922 = vmatpush.bf16.msra.mxu0 %v864
    %923 = vmatmul.bf16.gmra.mxu0 %v786
    %v924 = vpop.f32.mrf.mxu0
    %v925 = vadd.f32 0.0, %v924
    %v926 = vpop.f32.mrf.mxu0
    %v927 = vadd.f32 0.0, %v926
    %928 = vmatmul.bf16.gmra.mxu0 %v801
    %v929 = vpop.f32.mrf.mxu0
    %v930 = vadd.f32 0.0, %v929
    %v931 = vpop.f32.mrf.mxu0
    %932 = vdwg.mxu0
    %933 = vmatpush.bf16.msra.mxu0 0
    %934 = vmatpush.bf16.msra.mxu0 0
    %935 = vmatpush.bf16.msra.mxu0 0
    %936 = vmatpush.bf16.msra.mxu0 0
    %937 = vmatpush.bf16.msra.mxu0 0
    %938 = vmatpush.bf16.msra.mxu0 0
    %939 = vmatpush.bf16.msra.mxu0 %v910
    %940 = vmatpush.bf16.msra.mxu0 %v880
    %941 = vmatmul.bf16.gmra.mxu0 %v904
    %v942 = vpop.f32.mrf.mxu0
    %v943 = vadd.f32 %v925, %v942
    %v944 = vpop.f32.mrf.mxu0
    %v945 = vadd.f32 %v927, %v944
    %946 = vmatmul.bf16.gmra.mxu0 %v907
    %v947 = vpop.f32.mrf.mxu0
    %v948 = vadd.f32 %v930, %v947
    %v949 = vpop.f32.mrf.mxu0
    %950 = vdwg.mxu0
    %951 = vmatpush.bf16.msra.mxu0 %v879
    %952 = vmatpush.bf16.msra.mxu0 %v877
    %953 = vmatpush.bf16.msra.mxu0 %v875
    %954 = vmatpush.bf16.msra.mxu0 %v873
    %955 = vmatpush.bf16.msra.mxu0 %v871
    %956 = vmatpush.bf16.msra.mxu0 %v869
    %957 = vmatpush.bf16.msra.mxu0 %v867
    %958 = vmatpush.bf16.msra.mxu0 %v865
    %959 = vmatmul.bf16.gmra.mxu0 %v786
    %v960 = vpop.f32.mrf.mxu0
    %v961 = vadd.f32 0.0, %v960
    %v962 = vpop.f32.mrf.mxu0
    %v963 = vadd.f32 0.0, %v962
    %964 = vmatmul.bf16.gmra.mxu0 %v801
    %v965 = vpop.f32.mrf.mxu0
    %v966 = vadd.f32 0.0, %v965
    %v967 = vpop.f32.mrf.mxu0
    %968 = vdwg.mxu0
    %969 = vmatpush.bf16.msra.mxu0 0
    %970 = vmatpush.bf16.msra.mxu0 0
    %971 = vmatpush.bf16.msra.mxu0 0
    %972 = vmatpush.bf16.msra.mxu0 0
    %973 = vmatpush.bf16.msra.mxu0 0
    %974 = vmatpush.bf16.msra.mxu0 0
    %975 = vmatpush.bf16.msra.mxu0 %v913
    %976 = vmatpush.bf16.msra.mxu0 %v881
    %977 = vmatmul.bf16.gmra.mxu0 %v904
    %v978 = vpop.f32.mrf.mxu0
    %v979 = vadd.f32 %v961, %v978
    %v980 = vpop.f32.mrf.mxu0
    %v981 = vadd.f32 %v963, %v980
    %982 = vmatmul.bf16.gmra.mxu0 %v907
    %v983 = vpop.f32.mrf.mxu0
    %v984 = vadd.f32 %v966, %v983
    %v985 = vpop.f32.mrf.mxu0
    %986 = vdwg.mxu0
    %v987 = vpack.c.b16 %v767, %v767
    %v988 = vpack.c.b16 %v768, %v768
    %v1010 = vunpack.c.l.b16 %v720
    %v1011 = vunpack.c.h.b16 %v720
    %v1012 = vunpack.c.l.b16 %v721
    %v1013 = vunpack.c.h.b16 %v721
    %v1014 = vunpack.c.l.b16 %v722
    %v1015 = vunpack.c.h.b16 %v722
    %v1016 = vunpack.c.l.b16 %v723
    %v1017 = vunpack.c.h.b16 %v723
    %v1018 = vunpack.c.l.b16 %v724
    %v1019 = vunpack.c.h.b16 %v724
    %v1020 = vunpack.c.l.b16 %v725
    %v1021 = vunpack.c.h.b16 %v725
    %v1022 = vunpack.c.l.b16 %v726
    %v1023 = vunpack.c.h.b16 %v726
    %v1024 = vunpack.c.l.b16 %v727
    %v1025 = vunpack.c.h.b16 %v727
    %v1026 = vunpack.c.l.b16 %v728
    %v1027 = vunpack.c.h.b16 %v728
    %v1028 = vunpack.c.l.b16 %v729
    %v1029 = vunpack.c.h.b16 %v729
    %v1030 = vunpack.c.l.b16 %v730
    %v1031 = vunpack.c.h.b16 %v730
    %v1032 = vunpack.c.l.b16 %v731
    %v1033 = vunpack.c.h.b16 %v731
    %v1034 = vunpack.c.l.b16 %v732
    %v1035 = vunpack.c.h.b16 %v732
    %v1036 = vunpack.c.l.b16 %v733
    %v1037 = vunpack.c.h.b16 %v733
    %v1038 = vunpack.c.l.b16 %v734
    %v1039 = vunpack.c.h.b16 %v734
    %v1040 = vunpack.c.l.b16 %v735
    %v1041 = vunpack.c.h.b16 %v735
    %v1042 = vunpack.c.l.b16 %v736
    %v1043 = vunpack.c.h.b16 %v736
    %v1044 = vunpack.c.l.b16 %v737
    %v1045 = vunpack.c.h.b16 %v737
    %v1046 = vunpack.c.l.b16 %v738
    %v1047 = vunpack.c.h.b16 %v738
    %v1048 = vpack.c.b16 %v1012, %v1010
    %v1049 = vpack.c.b16 %v1013, %v1011
    %v1050 = vpack.c.b16 %v1016, %v1014
    %v1051 = vpack.c.b16 %v1017, %v1015
    %v1052 = vpack.c.b16 %v1020, %v1018
    %v1053 = vpack.c.b16 %v1021, %v1019
    %v1054 = vpack.c.b16 %v1024, %v1022
    %v1055 = vpack.c.b16 %v1025, %v1023
    %v1056 = vpack.c.b16 %v1028, %v1026
    %v1057 = vpack.c.b16 %v1029, %v1027
    %v1058 = vpack.c.b16 %v1032, %v1030
    %v1059 = vpack.c.b16 %v1033, %v1031
    %v1060 = vpack.c.b16 %v1036, %v1034
    %v1061 = vpack.c.b16 %v1037, %v1035
    %v1062 = vpack.c.b16 %v1040, %v1038
    %v1063 = vpack.c.b16 %v1041, %v1039
    %v1064 = vpack.c.b16 %v1044, %v1042
    %v1065 = vpack.c.b16 %v1045, %v1043
    %v1066 = vpack.c.b16 %v1046, %v1046
    %v1067 = vpack.c.b16 %v1047, %v1047
    %v1086 = vsel %vm902, %v772, 0
    %v1089 = vsel %vm902, %v988, 0
    %v1092 = vsel %vm624, %v1066, 0
    %v1095 = vsel %vm624, %v1067, 0
    %1097 = vmatpush.bf16.msra.mxu0 %v1062
    %1098 = vmatpush.bf16.msra.mxu0 %v1060
    %1099 = vmatpush.bf16.msra.mxu0 %v1058
    %1100 = vmatpush.bf16.msra.mxu0 %v1056
    %1101 = vmatpush.bf16.msra.mxu0 %v1054
    %1102 = vmatpush.bf16.msra.mxu0 %v1052
    %1103 = vmatpush.bf16.msra.mxu0 %v1050
    %1104 = vmatpush.bf16.msra.mxu0 %v1048
    %1105 = vmatmul.bf16.gmra.mxu0 %v771
    %v1106 = vpop.f32.mrf.mxu0
    %v1107 = vadd.f32 %v943, %v1106
    %v1108 = vpop.f32.mrf.mxu0
    %v1109 = vadd.f32 %v945, %v1108
    %1110 = vmatmul.bf16.gmra.mxu0 %v987
    %v1111 = vpop.f32.mrf.mxu0
    %v1112 = vadd.f32 %v948, %v1111
    %v1113 = vpop.f32.mrf.mxu0
    %1114 = vdwg.mxu0
    %1115 = vmatpush.bf16.msra.mxu0 0
    %1116 = vmatpush.bf16.msra.mxu0 0
    %1117 = vmatpush.bf16.msra.mxu0 0
    %1118 = vmatpush.bf16.msra.mxu0 0
    %1119 = vmatpush.bf16.msra.mxu0 0
    %1120 = vmatpush.bf16.msra.mxu0 0
    %1121 = vmatpush.bf16.msra.mxu0 %v1092
    %1122 = vmatpush.bf16.msra.mxu0 %v1064
    %1123 = vmatmul.bf16.gmra.mxu0 %v1086
    %v1124 = vpop.f32.mrf.mxu0
    %v1125 = vadd.f32 %v1107, %v1124
    %v1126 = vpop.f32.mrf.mxu0
    %v1127 = vadd.f32 %v1109, %v1126
    %1128 = vmatmul.bf16.gmra.mxu0 %v1089
    %v1129 = vpop.f32.mrf.mxu0
    %v1130 = vadd.f32 %v1112, %v1129
    %v1131 = vpop.f32.mrf.mxu0
    %1132 = vdwg.mxu0
    %1133 = vmatpush.bf16.msra.mxu0 %v1063
    %1134 = vmatpush.bf16.msra.mxu0 %v1061
    %1135 = vmatpush.bf16.msra.mxu0 %v1059
    %1136 = vmatpush.bf16.msra.mxu0 %v1057
    %1137 = vmatpush.bf16.msra.mxu0 %v1055
    %1138 = vmatpush.bf16.msra.mxu0 %v1053
    %1139 = vmatpush.bf16.msra.mxu0 %v1051
    %1140 = vmatpush.bf16.msra.mxu0 %v1049
    %1141 = vmatmul.bf16.gmra.mxu0 %v771
    %v1142 = vpop.f32.mrf.mxu0
    %v1143 = vadd.f32 %v979, %v1142
    %v1144 = vpop.f32.mrf.mxu0
    %v1145 = vadd.f32 %v981, %v1144
    %1146 = vmatmul.bf16.gmra.mxu0 %v987
    %v1147 = vpop.f32.mrf.mxu0
    %v1148 = vadd.f32 %v984, %v1147
    %v1149 = vpop.f32.mrf.mxu0
    %1150 = vdwg.mxu0
    %1151 = vmatpush.bf16.msra.mxu0 0
    %1152 = vmatpush.bf16.msra.mxu0 0
    %1153 = vmatpush.bf16.msra.mxu0 0
    %1154 = vmatpush.bf16.msra.mxu0 0
    %1155 = vmatpush.bf16.msra.mxu0 0
    %1156 = vmatpush.bf16.msra.mxu0 0
    %1157 = vmatpush.bf16.msra.mxu0 %v1095
    %1158 = vmatpush.bf16.msra.mxu0 %v1065
    %1159 = vmatmul.bf16.gmra.mxu0 %v1086
    %v1160 = vpop.f32.mrf.mxu0
    %v1161 = vadd.f32 %v1143, %v1160
    %v1162 = vpop.f32.mrf.mxu0
    %v1163 = vadd.f32 %v1145, %v1162
    %1164 = vmatmul.bf16.gmra.mxu0 %v1089
    %v1165 = vpop.f32.mrf.mxu0
    %v1166 = vadd.f32 %v1148, %v1165
    %v1167 = vpop.f32.mrf.mxu0
    %1168 = vdwg.mxu0
    %s1169 = scalar_lea.vmem [#allocation5], 304
    %v1170 = vld [vmem:[%s1169] sm:$0xff]
    %v1171 = vld [vmem:[%s1169 + $0x8] sm:$0xff]
    %v1172 = vld [vmem:[%s1169 + $0x10] sm:$0xff]
    %v1173 = vld [vmem:[%s1169 + $0x18] sm:$0xff]
    %v1174 = vld [vmem:[%s1169 + $0x20] sm:$0xff]
    %v1175 = vld [vmem:[%s1169 + $0x28] sm:$0xff]
    %v1176 = vld [vmem:[%s1169 + $0x30] sm:$0xff]
    %v1177 = vld [vmem:[%s1169 + $0x38] sm:$0xff]
    %v1178 = vld [vmem:[%s1169 + $0x40] sm:$0xff]
    %v1179 = vld [vmem:[%s1169 + $0x48] sm:$0xff]
    %v1180 = vld [vmem:[%s1169 + $0x50] sm:$0xff]
    %v1181 = vld [vmem:[%s1169 + $0x58] sm:$0xff]
    %v1182 = vld [vmem:[%s1169 + $0x60] sm:$0xff]
    %v1183 = vld [vmem:[%s1169 + $0x68] sm:$0xff]
    %v1184 = vld [vmem:[%s1169 + $0x70] sm:$0xff]
    %v1185 = vld [vmem:[%s1169 + $0x78] sm:$0xff]
    %v1186 = vld [vmem:[%s1169 + $0x80] sm:$0xff]
    %v1187 = vld [vmem:[%s1169 + $0x88] sm:$0xff]
    %v1188 = vld [vmem:[%s1169 + $0x90] sm:$0x77]
    %v1189 = vrot.slane %v771, 1
    %v1190 = vrot.slane %v773, 1
    %v1191 = vsel %vm377, %v1189, %v1190
    %v1192 = vrot.slane %v772, 1
    %v1193 = vrot.slane %v774, 1
    %v1194 = vsel %vm377, %v1192, %v1193
    %v1216 = vunpack.c.l.b16 %v1170
    %v1217 = vunpack.c.h.b16 %v1170
    %v1218 = vunpack.c.l.b16 %v1171
    %v1219 = vunpack.c.h.b16 %v1171
    %v1220 = vunpack.c.l.b16 %v1172
    %v1221 = vunpack.c.h.b16 %v1172
    %v1222 = vunpack.c.l.b16 %v1173
    %v1223 = vunpack.c.h.b16 %v1173
    %v1224 = vunpack.c.l.b16 %v1174
    %v1225 = vunpack.c.h.b16 %v1174
    %v1226 = vunpack.c.l.b16 %v1175
    %v1227 = vunpack.c.h.b16 %v1175
    %v1228 = vunpack.c.l.b16 %v1176
    %v1229 = vunpack.c.h.b16 %v1176
    %v1230 = vunpack.c.l.b16 %v1177
    %v1231 = vunpack.c.h.b16 %v1177
    %v1232 = vunpack.c.l.b16 %v1178
    %v1233 = vunpack.c.h.b16 %v1178
    %v1234 = vunpack.c.l.b16 %v1179
    %v1235 = vunpack.c.h.b16 %v1179
    %v1236 = vunpack.c.l.b16 %v1180
    %v1237 = vunpack.c.h.b16 %v1180
    %v1238 = vunpack.c.l.b16 %v1181
    %v1239 = vunpack.c.h.b16 %v1181
    %v1240 = vunpack.c.l.b16 %v1182
    %v1241 = vunpack.c.h.b16 %v1182
    %v1242 = vunpack.c.l.b16 %v1183
    %v1243 = vunpack.c.h.b16 %v1183
    %v1244 = vunpack.c.l.b16 %v1184
    %v1245 = vunpack.c.h.b16 %v1184
    %v1246 = vunpack.c.l.b16 %v1185
    %v1247 = vunpack.c.h.b16 %v1185
    %v1248 = vunpack.c.l.b16 %v1186
    %v1249 = vunpack.c.h.b16 %v1186
    %v1250 = vunpack.c.l.b16 %v1187
    %v1251 = vunpack.c.h.b16 %v1187
    %v1252 = vunpack.c.l.b16 %v1188
    %v1253 = vunpack.c.h.b16 %v1188
    %v1254 = vpack.c.b16 %v1218, %v1216
    %v1255 = vpack.c.b16 %v1219, %v1217
    %v1256 = vpack.c.b16 %v1222, %v1220
    %v1257 = vpack.c.b16 %v1223, %v1221
    %v1258 = vpack.c.b16 %v1226, %v1224
    %v1259 = vpack.c.b16 %v1227, %v1225
    %v1260 = vpack.c.b16 %v1230, %v1228
    %v1261 = vpack.c.b16 %v1231, %v1229
    %v1262 = vpack.c.b16 %v1234, %v1232
    %v1263 = vpack.c.b16 %v1235, %v1233
    %v1264 = vpack.c.b16 %v1238, %v1236
    %v1265 = vpack.c.b16 %v1239, %v1237
    %v1266 = vpack.c.b16 %v1242, %v1240
    %v1267 = vpack.c.b16 %v1243, %v1241
    %v1268 = vpack.c.b16 %v1246, %v1244
    %v1269 = vpack.c.b16 %v1247, %v1245
    %v1270 = vpack.c.b16 %v1250, %v1248
    %v1271 = vpack.c.b16 %v1251, %v1249
    %v1272 = vpack.c.b16 %v1252, %v1252
    %v1273 = vpack.c.b16 %v1253, %v1253
    %v1293 = vsel %vm902, %v1194, 0
    %v1296 = vsel %vm902, %v1193, 0
    %v1299 = vsel %vm624, %v1272, 0
    %v1302 = vsel %vm624, %v1273, 0
    %1304 = vmatpush.bf16.msra.mxu0 %v1268
    %1305 = vmatpush.bf16.msra.mxu0 %v1266
    %1306 = vmatpush.bf16.msra.mxu0 %v1264
    %1307 = vmatpush.bf16.msra.mxu0 %v1262
    %1308 = vmatpush.bf16.msra.mxu0 %v1260
    %1309 = vmatpush.bf16.msra.mxu0 %v1258
    %1310 = vmatpush.bf16.msra.mxu0 %v1256
    %1311 = vmatpush.bf16.msra.mxu0 %v1254
    %1312 = vmatmul.bf16.gmra.mxu0 %v1191
    %v1313 = vpop.f32.mrf.mxu0
    %v1314 = vadd.f32 0.0, %v1313
    %v1315 = vpop.f32.mrf.mxu0
    %v1316 = vadd.f32 0.0, %v1315
    %1317 = vmatmul.bf16.gmra.mxu0 %v1190
    %v1318 = vpop.f32.mrf.mxu0
    %v1319 = vadd.f32 0.0, %v1318
    %v1320 = vpop.f32.mrf.mxu0
    %1321 = vdwg.mxu0
    %1322 = vmatpush.bf16.msra.mxu0 0
    %1323 = vmatpush.bf16.msra.mxu0 0
    %1324 = vmatpush.bf16.msra.mxu0 0
    %1325 = vmatpush.bf16.msra.mxu0 0
    %1326 = vmatpush.bf16.msra.mxu0 0
    %1327 = vmatpush.bf16.msra.mxu0 0
    %1328 = vmatpush.bf16.msra.mxu0 %v1299
    %1329 = vmatpush.bf16.msra.mxu0 %v1270
    %1330 = vmatmul.bf16.gmra.mxu0 %v1293
    %v1331 = vpop.f32.mrf.mxu0
    %v1332 = vadd.f32 %v1314, %v1331
    %v1333 = vpop.f32.mrf.mxu0
    %v1334 = vadd.f32 %v1316, %v1333
    %1335 = vmatmul.bf16.gmra.mxu0 %v1296
    %v1336 = vpop.f32.mrf.mxu0
    %v1337 = vadd.f32 %v1319, %v1336
    %v1338 = vpop.f32.mrf.mxu0
    %1339 = vdwg.mxu0
    %1340 = vmatpush.bf16.msra.mxu0 %v1269
    %1341 = vmatpush.bf16.msra.mxu0 %v1267
    %1342 = vmatpush.bf16.msra.mxu0 %v1265
    %1343 = vmatpush.bf16.msra.mxu0 %v1263
    %1344 = vmatpush.bf16.msra.mxu0 %v1261
    %1345 = vmatpush.bf16.msra.mxu0 %v1259
    %1346 = vmatpush.bf16.msra.mxu0 %v1257
    %1347 = vmatpush.bf16.msra.mxu0 %v1255
    %1348 = vmatmul.bf16.gmra.mxu0 %v1191
    %v1349 = vpop.f32.mrf.mxu0
    %v1350 = vadd.f32 0.0, %v1349
    %v1351 = vpop.f32.mrf.mxu0
    %v1352 = vadd.f32 0.0, %v1351
    %1353 = vmatmul.bf16.gmra.mxu0 %v1190
    %v1354 = vpop.f32.mrf.mxu0
    %v1355 = vadd.f32 0.0, %v1354
    %v1356 = vpop.f32.mrf.mxu0
    %1357 = vdwg.mxu0
    %1358 = vmatpush.bf16.msra.mxu0 0
    %1359 = vmatpush.bf16.msra.mxu0 0
    %1360 = vmatpush.bf16.msra.mxu0 0
    %1361 = vmatpush.bf16.msra.mxu0 0
    %1362 = vmatpush.bf16.msra.mxu0 0
    %1363 = vmatpush.bf16.msra.mxu0 0
    %1364 = vmatpush.bf16.msra.mxu0 %v1302
    %1365 = vmatpush.bf16.msra.mxu0 %v1271
    %1366 = vmatmul.bf16.gmra.mxu0 %v1293
    %v1367 = vpop.f32.mrf.mxu0
    %v1368 = vadd.f32 %v1350, %v1367
    %v1369 = vpop.f32.mrf.mxu0
    %v1370 = vadd.f32 %v1352, %v1369
    %1371 = vmatmul.bf16.gmra.mxu0 %v1296
    %v1372 = vpop.f32.mrf.mxu0
    %v1373 = vadd.f32 %v1355, %v1372
    %v1374 = vpop.f32.mrf.mxu0
    %1375 = vdwg.mxu0
    %v1376 = vadd.f32 %v1125, %v1332
    %v1377 = vadd.f32 %v1161, %v1368
    %v1378 = vadd.f32 %v1127, %v1334
    %v1379 = vadd.f32 %v1163, %v1370
    %v1380 = vadd.f32 %v1130, %v1337
    %v1381 = vadd.f32 %v1166, %v1373
    %v1382 = vld [vmem:[%s5] sm:$0x3]
    %v1384 = vperm.slane %v1382, 0
    %v1385 = vperm.slane %v1382, 1
    %v1388 = vadd.f32 %v1376, %v1384
    %v1389 = vadd.f32 %v1377, %v1385
    %v1390 = vadd.f32 %v1378, %v1384
    %v1391 = vadd.f32 %v1379, %v1385
    %v1392 = vadd.f32 %v1380, %v1384
    %v1393 = vadd.f32 %v1381, %v1385
    %v1394 = vmax.f32 %v1388, 0.0
    %v1395 = vmax.f32 %v1389, 0.0
    %v1396 = vmax.f32 %v1390, 0.0
    %v1397 = vmax.f32 %v1391, 0.0
    %v1398 = vmax.f32 %v1392, 0.0
    %v1399 = vmax.f32 %v1393, 0.0
    %v1406 = vrot.slane %v1394, 1
    %v1407 = vrot.slane %v1396, 1
    %v1408 = vsel %vm539, %v1406, %v1407
    %v1409 = vrot.slane %v1395, 1
    %v1410 = vrot.slane %v1397, 1
    %v1411 = vsel %vm539, %v1409, %v1410
    %v1412 = vrot.slane %v1398, 1
    %v1413 = vsel %vm539, %v1407, %v1412
    %v1414 = vrot.slane %v1399, 1
    %v1415 = vsel %vm539, %v1410, %v1414
    %v1422 = vmax.f32 %v1394, %v1408
    %v1423 = vmax.f32 %v1395, %v1411
    %v1424 = vmax.f32 %v1396, %v1413
    %v1425 = vmax.f32 %v1397, %v1415
    %v1426 = vmax.f32 %v1398, %v1412
    %v1427 = vmax.f32 %v1399, %v1414
    %v1428 = vpack.c.bf16 %v1424, %v1422
    %v1429 = vpack.c.bf16 %v1425, %v1423
    %v1430 = vpack.c.bf16 %v1426, %v1426
    %v1431 = vpack.c.bf16 %v1427, %v1427
    %v1432 = vld [vmem:[%s6] sm:$0x1]
    %vm1433 = vcmask 187392
    %v1435 = vsel %vm1433, %v1432, 0
    %vm1437 = vcmask 1043456
    %v1438 = vsel %vm624, 4294967295, 65535
    %v1439 = vsel %vm1437, %v1438, 0
    %v1441 = vand.u32 %v1430, %v1439
    %v1444 = vand.u32 %v1431, %v1439
    %1446 = vmatpush.bf16.msra.mxu0 0
    %1447 = vmatpush.bf16.msra.mxu0 0
    %1448 = vmatpush.bf16.msra.mxu0 0
    %1449 = vmatpush.bf16.msra.mxu0 0
    %1450 = vmatpush.bf16.msra.mxu0 0
    %1451 = vmatpush.bf16.msra.mxu0 0
    %1452 = vmatpush.bf16.msra.mxu0 %v1441
    %1453 = vmatpush.bf16.msra.mxu0 %v1428
    %1454 = vmatmul.bf16.gmra.mxu0 %v1435
    %v1455 = vpop.f32.mrf.mxu0
    %v1456 = vadd.f32 0.0, %v1455
    %v1457 = vpop.f32.mrf.mxu0
    %1458 = vdwg.mxu0
    %1459 = vmatpush.bf16.msra.mxu0 0
    %1460 = vmatpush.bf16.msra.mxu0 0
    %1461 = vmatpush.bf16.msra.mxu0 0
    %1462 = vmatpush.bf16.msra.mxu0 0
    %1463 = vmatpush.bf16.msra.mxu0 0
    %1464 = vmatpush.bf16.msra.mxu0 0
    %1465 = vmatpush.bf16.msra.mxu0 %v1444
    %1466 = vmatpush.bf16.msra.mxu0 %v1429
    %1467 = vmatmul.bf16.gmra.mxu0 %v1435
    %v1468 = vpop.f32.mrf.mxu0
    %v1469 = vadd.f32 0.0, %v1468
    %v1470 = vpop.f32.mrf.mxu0
    %1471 = vdwg.mxu0
    %1474 = vrot.lane.b32.xlu0 %v1456, 112
    %v1475 = vpop.permute.xlu0 %1474
    %1476 = vrot.lane.b32.xlu0 %v1469, 112
    %v1477 = vpop.permute.xlu0 %1476
    %vm1478 = vcmask 916480
    %v1479 = vsel %vm1478, %v1475, %v1477
    %v1482 = vmax.f32 %v1456, %v1479
    %v1483 = vmax.f32 %v1469, %v1477
    %v1484 = vpack.c.bf16 %v1482, %v1482
    %v1485 = vpack.c.bf16 %v1483, %v1483
    %v1486 = vld [vmem:[#allocation7] sm:$0xf]
    %v1487 = vld [vmem:[#allocation7 + $0x4] sm:$0xf]
    %v1488 = vld [vmem:[#allocation7 + $0x8] sm:$0xf]
    %v1489 = vld [vmem:[#allocation7 + $0xc] sm:$0xf]
    %v1490 = vld [vmem:[#allocation7 + $0x10] sm:$0xf]
    %v1491 = vld [vmem:[#allocation7 + $0x14] sm:$0xf]
    %v1492 = vld [vmem:[#allocation7 + $0x18] sm:$0xf]
    %v1493 = vld [vmem:[#allocation7 + $0x1c] sm:$0xf]
    %v1494 = vld [vmem:[#allocation7 + $0x20] sm:$0xf]
    %v1495 = vld [vmem:[#allocation7 + $0x24] sm:$0xf]
    %v1496 = vld [vmem:[#allocation7 + $0x28] sm:$0xf]
    %v1497 = vld [vmem:[#allocation7 + $0x2c] sm:$0xf]
    %v1498 = vld [vmem:[#allocation7 + $0x30] sm:$0xf]
    %v1499 = vld [vmem:[#allocation7 + $0x34] sm:$0xf]
    %v1500 = vld [vmem:[#allocation7 + $0x38] sm:$0xf]
    %v1501 = vld [vmem:[#allocation7 + $0x3c] sm:$0xf]
    %v1502 = vld [vmem:[#allocation7 + $0x40] sm:$0xf]
    %v1503 = vld [vmem:[#allocation7 + $0x44] sm:$0xf]
    %v1504 = vld [vmem:[#allocation7 + $0x48] sm:$0xf]
    %v1505 = vld [vmem:[#allocation7 + $0x4c] sm:$0xf]
    %s1506 = scalar_lea.vmem %s6, 1
    %v1507 = vld [vmem:[%s1506] sm:$0x1]
    %v1509 = vsel %vm1433, %v1507, 0
    %1511 = vmatpush.bf16.msra.mxu0 0
    %1512 = vmatpush.bf16.msra.mxu0 0
    %1513 = vmatpush.bf16.msra.mxu0 0
    %1514 = vmatpush.bf16.msra.mxu0 0
    %1515 = vmatpush.bf16.msra.mxu0 0
    %1516 = vmatpush.bf16.msra.mxu0 0
    %1517 = vmatpush.bf16.msra.mxu0 %v1441
    %1518 = vmatpush.bf16.msra.mxu0 %v1428
    %1519 = vmatmul.bf16.gmra.mxu0 %v1509
    %v1520 = vpop.f32.mrf.mxu0
    %v1521 = vadd.f32 0.0, %v1520
    %v1522 = vpop.f32.mrf.mxu0
    %1523 = vdwg.mxu0
    %1524 = vmatpush.bf16.msra.mxu0 0
    %1525 = vmatpush.bf16.msra.mxu0 0
    %1526 = vmatpush.bf16.msra.mxu0 0
    %1527 = vmatpush.bf16.msra.mxu0 0
    %1528 = vmatpush.bf16.msra.mxu0 0
    %1529 = vmatpush.bf16.msra.mxu0 0
    %1530 = vmatpush.bf16.msra.mxu0 %v1444
    %1531 = vmatpush.bf16.msra.mxu0 %v1429
    %1532 = vmatmul.bf16.gmra.mxu0 %v1509
    %v1533 = vpop.f32.mrf.mxu0
    %v1534 = vadd.f32 0.0, %v1533
    %v1535 = vpop.f32.mrf.mxu0
    %1536 = vdwg.mxu0
    %1539 = vrot.lane.b32.xlu0 %v1521, 112
    %v1540 = vpop.permute.xlu0 %1539
    %1541 = vrot.lane.b32.xlu0 %v1534, 112
    %v1542 = vpop.permute.xlu0 %1541
    %v1543 = vsel %vm1478, %v1540, %v1542
    %v1546 = vmax.f32 %v1521, %v1543
    %v1547 = vmax.f32 %v1534, %v1542
    %v1548 = vpack.c.bf16 %v1546, %v1546
    %v1549 = vpack.c.bf16 %v1547, %v1547
    %s1550 = scalar_lea.vmem [#allocation7], 80
    %v1551 = vld [vmem:[%s1550] sm:$0xf]
    %v1552 = vld [vmem:[%s1550 + $0x4] sm:$0xf]
    %v1553 = vld [vmem:[%s1550 + $0x8] sm:$0xf]
    %v1554 = vld [vmem:[%s1550 + $0xc] sm:$0xf]
    %v1555 = vld [vmem:[%s1550 + $0x10] sm:$0xf]
    %v1556 = vld [vmem:[%s1550 + $0x14] sm:$0xf]
    %v1557 = vld [vmem:[%s1550 + $0x18] sm:$0xf]
    %v1558 = vld [vmem:[%s1550 + $0x1c] sm:$0xf]
    %v1559 = vld [vmem:[%s1550 + $0x20] sm:$0xf]
    %v1560 = vld [vmem:[%s1550 + $0x24] sm:$0xf]
    %v1561 = vld [vmem:[%s1550 + $0x28] sm:$0xf]
    %v1562 = vld [vmem:[%s1550 + $0x2c] sm:$0xf]
    %v1563 = vld [vmem:[%s1550 + $0x30] sm:$0xf]
    %v1564 = vld [vmem:[%s1550 + $0x34] sm:$0xf]
    %v1565 = vld [vmem:[%s1550 + $0x38] sm:$0xf]
    %v1566 = vld [vmem:[%s1550 + $0x3c] sm:$0xf]
    %v1567 = vld [vmem:[%s1550 + $0x40] sm:$0xf]
    %v1568 = vld [vmem:[%s1550 + $0x44] sm:$0xf]
    %v1569 = vld [vmem:[%s1550 + $0x48] sm:$0xf]
    %v1570 = vld [vmem:[%s1550 + $0x4c] sm:$0xf]
    %v1591 = vunpack.c.l.b16 %v1551
    %v1592 = vunpack.c.l.b16 %v1552
    %v1593 = vunpack.c.l.b16 %v1553
    %v1594 = vunpack.c.l.b16 %v1554
    %v1595 = vunpack.c.l.b16 %v1555
    %v1596 = vunpack.c.l.b16 %v1556
    %v1597 = vunpack.c.l.b16 %v1557
    %v1598 = vunpack.c.l.b16 %v1558
    %v1599 = vunpack.c.l.b16 %v1559
    %v1600 = vunpack.c.l.b16 %v1560
    %v1601 = vunpack.c.l.b16 %v1561
    %v1602 = vunpack.c.l.b16 %v1562
    %v1603 = vunpack.c.l.b16 %v1563
    %v1604 = vunpack.c.l.b16 %v1564
    %v1605 = vunpack.c.l.b16 %v1565
    %v1606 = vunpack.c.l.b16 %v1566
    %v1607 = vunpack.c.l.b16 %v1567
    %v1608 = vunpack.c.l.b16 %v1568
    %v1609 = vunpack.c.l.b16 %v1569
    %v1610 = vunpack.c.l.b16 %v1570
    %v1611 = vpack.c.b16 %v1592, %v1591
    %v1612 = vpack.c.b16 %v1594, %v1593
    %v1613 = vpack.c.b16 %v1596, %v1595
    %v1614 = vpack.c.b16 %v1598, %v1597
    %v1615 = vpack.c.b16 %v1600, %v1599
    %v1616 = vpack.c.b16 %v1602, %v1601
    %v1617 = vpack.c.b16 %v1604, %v1603
    %v1618 = vpack.c.b16 %v1606, %v1605
    %v1619 = vpack.c.b16 %v1608, %v1607
    %v1620 = vpack.c.b16 %v1610, %v1609
    %vm1631 = vcmask 261120
    %v1633 = vsel %vm1631, %v1549, 0
    %1635 = vmatpush.bf16.msra.mxu0 %v1618
    %1636 = vmatpush.bf16.msra.mxu0 %v1617
    %1637 = vmatpush.bf16.msra.mxu0 %v1616
    %1638 = vmatpush.bf16.msra.mxu0 %v1615
    %1639 = vmatpush.bf16.msra.mxu0 %v1614
    %1640 = vmatpush.bf16.msra.mxu0 %v1613
    %1641 = vmatpush.bf16.msra.mxu0 %v1612
    %1642 = vmatpush.bf16.msra.mxu0 %v1611
    %1643 = vmatmul.bf16.gmra.mxu0 %v1548
    %v1644 = vpop.f32.mrf.mxu0
    %v1645 = vadd.f32 0.0, %v1644
    %v1646 = vpop.f32.mrf.mxu0
    %1647 = vdwg.mxu0
    %1648 = vmatpush.bf16.msra.mxu0 0
    %1649 = vmatpush.bf16.msra.mxu0 0
    %1650 = vmatpush.bf16.msra.mxu0 0
    %1651 = vmatpush.bf16.msra.mxu0 0
    %1652 = vmatpush.bf16.msra.mxu0 0
    %1653 = vmatpush.bf16.msra.mxu0 0
    %1654 = vmatpush.bf16.msra.mxu0 %v1620
    %1655 = vmatpush.bf16.msra.mxu0 %v1619
    %1656 = vmatmul.bf16.gmra.mxu0 %v1633
    %v1657 = vpop.f32.mrf.mxu0
    %v1658 = vadd.f32 %v1645, %v1657
    %v1659 = vpop.f32.mrf.mxu0
    %1660 = vdwg.mxu0
    %v1681 = vunpack.c.l.b16 %v1486
    %v1682 = vunpack.c.l.b16 %v1487
    %v1683 = vunpack.c.l.b16 %v1488
    %v1684 = vunpack.c.l.b16 %v1489
    %v1685 = vunpack.c.l.b16 %v1490
    %v1686 = vunpack.c.l.b16 %v1491
    %v1687 = vunpack.c.l.b16 %v1492
    %v1688 = vunpack.c.l.b16 %v1493
    %v1689 = vunpack.c.l.b16 %v1494
    %v1690 = vunpack.c.l.b16 %v1495
    %v1691 = vunpack.c.l.b16 %v1496
    %v1692 = vunpack.c.l.b16 %v1497
    %v1693 = vunpack.c.l.b16 %v1498
    %v1694 = vunpack.c.l.b16 %v1499
    %v1695 = vunpack.c.l.b16 %v1500
    %v1696 = vunpack.c.l.b16 %v1501
    %v1697 = vunpack.c.l.b16 %v1502
    %v1698 = vunpack.c.l.b16 %v1503
    %v1699 = vunpack.c.l.b16 %v1504
    %v1700 = vunpack.c.l.b16 %v1505
    %v1701 = vpack.c.b16 %v1682, %v1681
    %v1702 = vpack.c.b16 %v1684, %v1683
    %v1703 = vpack.c.b16 %v1686, %v1685
    %v1704 = vpack.c.b16 %v1688, %v1687
    %v1705 = vpack.c.b16 %v1690, %v1689
    %v1706 = vpack.c.b16 %v1692, %v1691
    %v1707 = vpack.c.b16 %v1694, %v1693
    %v1708 = vpack.c.b16 %v1696, %v1695
    %v1709 = vpack.c.b16 %v1698, %v1697
    %v1710 = vpack.c.b16 %v1700, %v1699
    %v1722 = vsel %vm1631, %v1485, 0
    %1724 = vmatpush.bf16.msra.mxu0 %v1708
    %1725 = vmatpush.bf16.msra.mxu0 %v1707
    %1726 = vmatpush.bf16.msra.mxu0 %v1706
    %1727 = vmatpush.bf16.msra.mxu0 %v1705
    %1728 = vmatpush.bf16.msra.mxu0 %v1704
    %1729 = vmatpush.bf16.msra.mxu0 %v1703
    %1730 = vmatpush.bf16.msra.mxu0 %v1702
    %1731 = vmatpush.bf16.msra.mxu0 %v1701
    %1732 = vmatmul.bf16.gmra.mxu0 %v1484
    %v1733 = vpop.f32.mrf.mxu0
    %v1734 = vadd.f32 %v1658, %v1733
    %v1735 = vpop.f32.mrf.mxu0
    %1736 = vdwg.mxu0
    %1737 = vmatpush.bf16.msra.mxu0 0
    %1738 = vmatpush.bf16.msra.mxu0 0
    %1739 = vmatpush.bf16.msra.mxu0 0
    %1740 = vmatpush.bf16.msra.mxu0 0
    %1741 = vmatpush.bf16.msra.mxu0 0
    %1742 = vmatpush.bf16.msra.mxu0 0
    %1743 = vmatpush.bf16.msra.mxu0 %v1710
    %1744 = vmatpush.bf16.msra.mxu0 %v1709
    %1745 = vmatmul.bf16.gmra.mxu0 %v1722
    %v1746 = vpop.f32.mrf.mxu0
    %v1747 = vadd.f32 %v1734, %v1746
    %v1748 = vpop.f32.mrf.mxu0
    %1749 = vdwg.mxu0
    %s1750 = scalar_lea.vmem %s6, 2
    %v1751 = vld [vmem:[%s1750] sm:$0x1]
    %v1753 = vsel %vm1433, %v1751, 0
    %1755 = vmatpush.bf16.msra.mxu0 0
    %1756 = vmatpush.bf16.msra.mxu0 0
    %1757 = vmatpush.bf16.msra.mxu0 0
    %1758 = vmatpush.bf16.msra.mxu0 0
    %1759 = vmatpush.bf16.msra.mxu0 0
    %1760 = vmatpush.bf16.msra.mxu0 0
    %1761 = vmatpush.bf16.msra.mxu0 %v1441
    %1762 = vmatpush.bf16.msra.mxu0 %v1428
    %1763 = vmatmul.bf16.gmra.mxu0 %v1753
    %v1764 = vpop.f32.mrf.mxu0
    %v1765 = vadd.f32 0.0, %v1764
    %v1766 = vpop.f32.mrf.mxu0
    %1767 = vdwg.mxu0
    %1768 = vmatpush.bf16.msra.mxu0 0
    %1769 = vmatpush.bf16.msra.mxu0 0
    %1770 = vmatpush.bf16.msra.mxu0 0
    %1771 = vmatpush.bf16.msra.mxu0 0
    %1772 = vmatpush.bf16.msra.mxu0 0
    %1773 = vmatpush.bf16.msra.mxu0 0
    %1774 = vmatpush.bf16.msra.mxu0 %v1444
    %1775 = vmatpush.bf16.msra.mxu0 %v1429
    %1776 = vmatmul.bf16.gmra.mxu0 %v1753
    %v1777 = vpop.f32.mrf.mxu0
    %v1778 = vadd.f32 0.0, %v1777
    %v1779 = vpop.f32.mrf.mxu0
    %1780 = vdwg.mxu0
    %1783 = vrot.lane.b32.xlu0 %v1765, 112
    %v1784 = vpop.permute.xlu0 %1783
    %1785 = vrot.lane.b32.xlu0 %v1778, 112
    %v1786 = vpop.permute.xlu0 %1785
    %v1787 = vsel %vm1478, %v1784, %v1786
    %v1790 = vmax.f32 %v1765, %v1787
    %v1791 = vmax.f32 %v1778, %v1786
    %v1792 = vpack.c.bf16 %v1790, %v1790
    %v1793 = vpack.c.bf16 %v1791, %v1791
    %s1794 = scalar_lea.vmem [#allocation7], 160
    %v1795 = vld [vmem:[%s1794] sm:$0xf]
    %v1796 = vld [vmem:[%s1794 + $0x4] sm:$0xf]
    %v1797 = vld [vmem:[%s1794 + $0x8] sm:$0xf]
    %v1798 = vld [vmem:[%s1794 + $0xc] sm:$0xf]
    %v1799 = vld [vmem:[%s1794 + $0x10] sm:$0xf]
    %v1800 = vld [vmem:[%s1794 + $0x14] sm:$0xf]
    %v1801 = vld [vmem:[%s1794 + $0x18] sm:$0xf]
    %v1802 = vld [vmem:[%s1794 + $0x1c] sm:$0xf]
    %v1803 = vld [vmem:[%s1794 + $0x20] sm:$0xf]
    %v1804 = vld [vmem:[%s1794 + $0x24] sm:$0xf]
    %v1805 = vld [vmem:[%s1794 + $0x28] sm:$0xf]
    %v1806 = vld [vmem:[%s1794 + $0x2c] sm:$0xf]
    %v1807 = vld [vmem:[%s1794 + $0x30] sm:$0xf]
    %v1808 = vld [vmem:[%s1794 + $0x34] sm:$0xf]
    %v1809 = vld [vmem:[%s1794 + $0x38] sm:$0xf]
    %v1810 = vld [vmem:[%s1794 + $0x3c] sm:$0xf]
    %v1811 = vld [vmem:[%s1794 + $0x40] sm:$0xf]
    %v1812 = vld [vmem:[%s1794 + $0x44] sm:$0xf]
    %v1813 = vld [vmem:[%s1794 + $0x48] sm:$0xf]
    %v1814 = vld [vmem:[%s1794 + $0x4c] sm:$0xf]
    %v1835 = vunpack.c.l.b16 %v1795
    %v1836 = vunpack.c.l.b16 %v1796
    %v1837 = vunpack.c.l.b16 %v1797
    %v1838 = vunpack.c.l.b16 %v1798
    %v1839 = vunpack.c.l.b16 %v1799
    %v1840 = vunpack.c.l.b16 %v1800
    %v1841 = vunpack.c.l.b16 %v1801
    %v1842 = vunpack.c.l.b16 %v1802
    %v1843 = vunpack.c.l.b16 %v1803
    %v1844 = vunpack.c.l.b16 %v1804
    %v1845 = vunpack.c.l.b16 %v1805
    %v1846 = vunpack.c.l.b16 %v1806
    %v1847 = vunpack.c.l.b16 %v1807
    %v1848 = vunpack.c.l.b16 %v1808
    %v1849 = vunpack.c.l.b16 %v1809
    %v1850 = vunpack.c.l.b16 %v1810
    %v1851 = vunpack.c.l.b16 %v1811
    %v1852 = vunpack.c.l.b16 %v1812
    %v1853 = vunpack.c.l.b16 %v1813
    %v1854 = vunpack.c.l.b16 %v1814
    %v1855 = vpack.c.b16 %v1836, %v1835
    %v1856 = vpack.c.b16 %v1838, %v1837
    %v1857 = vpack.c.b16 %v1840, %v1839
    %v1858 = vpack.c.b16 %v1842, %v1841
    %v1859 = vpack.c.b16 %v1844, %v1843
    %v1860 = vpack.c.b16 %v1846, %v1845
    %v1861 = vpack.c.b16 %v1848, %v1847
    %v1862 = vpack.c.b16 %v1850, %v1849
    %v1863 = vpack.c.b16 %v1852, %v1851
    %v1864 = vpack.c.b16 %v1854, %v1853
    %v1876 = vsel %vm1631, %v1793, 0
    %1878 = vmatpush.bf16.msra.mxu0 %v1862
    %1879 = vmatpush.bf16.msra.mxu0 %v1861
    %1880 = vmatpush.bf16.msra.mxu0 %v1860
    %1881 = vmatpush.bf16.msra.mxu0 %v1859
    %1882 = vmatpush.bf16.msra.mxu0 %v1858
    %1883 = vmatpush.bf16.msra.mxu0 %v1857
    %1884 = vmatpush.bf16.msra.mxu0 %v1856
    %1885 = vmatpush.bf16.msra.mxu0 %v1855
    %1886 = vmatmul.bf16.gmra.mxu0 %v1792
    %v1887 = vpop.f32.mrf.mxu0
    %v1888 = vadd.f32 0.0, %v1887
    %v1889 = vpop.f32.mrf.mxu0
    %1890 = vdwg.mxu0
    %1891 = vmatpush.bf16.msra.mxu0 0
    %1892 = vmatpush.bf16.msra.mxu0 0
    %1893 = vmatpush.bf16.msra.mxu0 0
    %1894 = vmatpush.bf16.msra.mxu0 0
    %1895 = vmatpush.bf16.msra.mxu0 0
    %1896 = vmatpush.bf16.msra.mxu0 0
    %1897 = vmatpush.bf16.msra.mxu0 %v1864
    %1898 = vmatpush.bf16.msra.mxu0 %v1863
    %1899 = vmatmul.bf16.gmra.mxu0 %v1876
    %v1900 = vpop.f32.mrf.mxu0
    %v1901 = vadd.f32 %v1888, %v1900
    %v1902 = vpop.f32.mrf.mxu0
    %1903 = vdwg.mxu0
    %v1904 = vadd.f32 %v1747, %v1901
    %s1905 = scalar_lea.vmem %s6, 3
    %v1906 = vld [vmem:[%s1905] sm:$0x1]
    %v1908 = vsel %vm1433, %v1906, 0
    %1910 = vmatpush.bf16.msra.mxu0 0
    %1911 = vmatpush.bf16.msra.mxu0 0
    %1912 = vmatpush.bf16.msra.mxu0 0
    %1913 = vmatpush.bf16.msra.mxu0 0
    %1914 = vmatpush.bf16.msra.mxu0 0
    %1915 = vmatpush.bf16.msra.mxu0 0
    %1916 = vmatpush.bf16.msra.mxu0 %v1441
    %1917 = vmatpush.bf16.msra.mxu0 %v1428
    %1918 = vmatmul.bf16.gmra.mxu0 %v1908
    %v1919 = vpop.f32.mrf.mxu0
    %v1920 = vadd.f32 0.0, %v1919
    %v1921 = vpop.f32.mrf.mxu0
    %1922 = vdwg.mxu0
    %1923 = vmatpush.bf16.msra.mxu0 0
    %1924 = vmatpush.bf16.msra.mxu0 0
    %1925 = vmatpush.bf16.msra.mxu0 0
    %1926 = vmatpush.bf16.msra.mxu0 0
    %1927 = vmatpush.bf16.msra.mxu0 0
    %1928 = vmatpush.bf16.msra.mxu0 0
    %1929 = vmatpush.bf16.msra.mxu0 %v1444
    %1930 = vmatpush.bf16.msra.mxu0 %v1429
    %1931 = vmatmul.bf16.gmra.mxu0 %v1908
    %v1932 = vpop.f32.mrf.mxu0
    %v1933 = vadd.f32 0.0, %v1932
    %v1934 = vpop.f32.mrf.mxu0
    %1935 = vdwg.mxu0
    %1938 = vrot.lane.b32.xlu0 %v1920, 112
    %v1939 = vpop.permute.xlu0 %1938
    %1940 = vrot.lane.b32.xlu0 %v1933, 112
    %v1941 = vpop.permute.xlu0 %1940
    %v1942 = vsel %vm1478, %v1939, %v1941
    %v1945 = vmax.f32 %v1920, %v1942
    %v1946 = vmax.f32 %v1933, %v1941
    %v1947 = vpack.c.bf16 %v1945, %v1945
    %v1948 = vpack.c.bf16 %v1946, %v1946
    %s1949 = scalar_lea.vmem [#allocation7], 240
    %v1950 = vld [vmem:[%s1949] sm:$0xf]
    %v1951 = vld [vmem:[%s1949 + $0x4] sm:$0xf]
    %v1952 = vld [vmem:[%s1949 + $0x8] sm:$0xf]
    %v1953 = vld [vmem:[%s1949 + $0xc] sm:$0xf]
    %v1954 = vld [vmem:[%s1949 + $0x10] sm:$0xf]
    %v1955 = vld [vmem:[%s1949 + $0x14] sm:$0xf]
    %v1956 = vld [vmem:[%s1949 + $0x18] sm:$0xf]
    %v1957 = vld [vmem:[%s1949 + $0x1c] sm:$0xf]
    %v1958 = vld [vmem:[%s1949 + $0x20] sm:$0xf]
    %v1959 = vld [vmem:[%s1949 + $0x24] sm:$0xf]
    %v1960 = vld [vmem:[%s1949 + $0x28] sm:$0xf]
    %v1961 = vld [vmem:[%s1949 + $0x2c] sm:$0xf]
    %v1962 = vld [vmem:[%s1949 + $0x30] sm:$0xf]
    %v1963 = vld [vmem:[%s1949 + $0x34] sm:$0xf]
    %v1964 = vld [vmem:[%s1949 + $0x38] sm:$0xf]
    %v1965 = vld [vmem:[%s1949 + $0x3c] sm:$0xf]
    %v1966 = vld [vmem:[%s1949 + $0x40] sm:$0xf]
    %v1967 = vld [vmem:[%s1949 + $0x44] sm:$0xf]
    %v1968 = vld [vmem:[%s1949 + $0x48] sm:$0xf]
    %v1969 = vld [vmem:[%s1949 + $0x4c] sm:$0xf]
    %v1990 = vunpack.c.l.b16 %v1950
    %v1991 = vunpack.c.l.b16 %v1951
    %v1992 = vunpack.c.l.b16 %v1952
    %v1993 = vunpack.c.l.b16 %v1953
    %v1994 = vunpack.c.l.b16 %v1954
    %v1995 = vunpack.c.l.b16 %v1955
    %v1996 = vunpack.c.l.b16 %v1956
    %v1997 = vunpack.c.l.b16 %v1957
    %v1998 = vunpack.c.l.b16 %v1958
    %v1999 = vunpack.c.l.b16 %v1959
    %v2000 = vunpack.c.l.b16 %v1960
    %v2001 = vunpack.c.l.b16 %v1961
    %v2002 = vunpack.c.l.b16 %v1962
    %v2003 = vunpack.c.l.b16 %v1963
    %v2004 = vunpack.c.l.b16 %v1964
    %v2005 = vunpack.c.l.b16 %v1965
    %v2006 = vunpack.c.l.b16 %v1966
    %v2007 = vunpack.c.l.b16 %v1967
    %v2008 = vunpack.c.l.b16 %v1968
    %v2009 = vunpack.c.l.b16 %v1969
    %v2010 = vpack.c.b16 %v1991, %v1990
    %v2011 = vpack.c.b16 %v1993, %v1992
    %v2012 = vpack.c.b16 %v1995, %v1994
    %v2013 = vpack.c.b16 %v1997, %v1996
    %v2014 = vpack.c.b16 %v1999, %v1998
    %v2015 = vpack.c.b16 %v2001, %v2000
    %v2016 = vpack.c.b16 %v2003, %v2002
    %v2017 = vpack.c.b16 %v2005, %v2004
    %v2018 = vpack.c.b16 %v2007, %v2006
    %v2019 = vpack.c.b16 %v2009, %v2008
    %v2031 = vsel %vm1631, %v1948, 0
    %2033 = vmatpush.bf16.msra.mxu0 %v2017
    %2034 = vmatpush.bf16.msra.mxu0 %v2016
    %2035 = vmatpush.bf16.msra.mxu0 %v2015
    %2036 = vmatpush.bf16.msra.mxu0 %v2014
    %2037 = vmatpush.bf16.msra.mxu0 %v2013
    %2038 = vmatpush.bf16.msra.mxu0 %v2012
    %2039 = vmatpush.bf16.msra.mxu0 %v2011
    %2040 = vmatpush.bf16.msra.mxu0 %v2010
    %2041 = vmatmul.bf16.gmra.mxu0 %v1947
    %v2042 = vpop.f32.mrf.mxu0
    %v2043 = vadd.f32 0.0, %v2042
    %v2044 = vpop.f32.mrf.mxu0
    %2045 = vdwg.mxu0
    %2046 = vmatpush.bf16.msra.mxu0 0
    %2047 = vmatpush.bf16.msra.mxu0 0
    %2048 = vmatpush.bf16.msra.mxu0 0
    %2049 = vmatpush.bf16.msra.mxu0 0
    %2050 = vmatpush.bf16.msra.mxu0 0
    %2051 = vmatpush.bf16.msra.mxu0 0
    %2052 = vmatpush.bf16.msra.mxu0 %v2019
    %2053 = vmatpush.bf16.msra.mxu0 %v2018
    %2054 = vmatmul.bf16.gmra.mxu0 %v2031
    %v2055 = vpop.f32.mrf.mxu0
    %v2056 = vadd.f32 %v2043, %v2055
    %v2057 = vpop.f32.mrf.mxu0
    %2058 = vdwg.mxu0
    %v2059 = vadd.f32 %v1904, %v2056
    %s2060 = scalar_lea.vmem %s6, 4
    %v2061 = vld [vmem:[%s2060] sm:$0x1]
    %v2063 = vsel %vm1433, %v2061, 0
    %2065 = vmatpush.bf16.msra.mxu0 0
    %2066 = vmatpush.bf16.msra.mxu0 0
    %2067 = vmatpush.bf16.msra.mxu0 0
    %2068 = vmatpush.bf16.msra.mxu0 0
    %2069 = vmatpush.bf16.msra.mxu0 0
    %2070 = vmatpush.bf16.msra.mxu0 0
    %2071 = vmatpush.bf16.msra.mxu0 %v1441
    %2072 = vmatpush.bf16.msra.mxu0 %v1428
    %2073 = vmatmul.bf16.gmra.mxu0 %v2063
    %v2074 = vpop.f32.mrf.mxu0
    %v2075 = vadd.f32 0.0, %v2074
    %v2076 = vpop.f32.mrf.mxu0
    %2077 = vdwg.mxu0
    %2078 = vmatpush.bf16.msra.mxu0 0
    %2079 = vmatpush.bf16.msra.mxu0 0
    %2080 = vmatpush.bf16.msra.mxu0 0
    %2081 = vmatpush.bf16.msra.mxu0 0
    %2082 = vmatpush.bf16.msra.mxu0 0
    %2083 = vmatpush.bf16.msra.mxu0 0
    %2084 = vmatpush.bf16.msra.mxu0 %v1444
    %2085 = vmatpush.bf16.msra.mxu0 %v1429
    %2086 = vmatmul.bf16.gmra.mxu0 %v2063
    %v2087 = vpop.f32.mrf.mxu0
    %v2088 = vadd.f32 0.0, %v2087
    %v2089 = vpop.f32.mrf.mxu0
    %2090 = vdwg.mxu0
    %2093 = vrot.lane.b32.xlu0 %v2075, 112
    %v2094 = vpop.permute.xlu0 %2093
    %2095 = vrot.lane.b32.xlu0 %v2088, 112
    %v2096 = vpop.permute.xlu0 %2095
    %v2097 = vsel %vm1478, %v2094, %v2096
    %v2100 = vmax.f32 %v2075, %v2097
    %v2101 = vmax.f32 %v2088, %v2096
    %v2102 = vpack.c.bf16 %v2100, %v2100
    %v2103 = vpack.c.bf16 %v2101, %v2101
    %s2104 = scalar_lea.vmem [#allocation7], 320
    %v2105 = vld [vmem:[%s2104] sm:$0xf]
    %v2106 = vld [vmem:[%s2104 + $0x4] sm:$0xf]
    %v2107 = vld [vmem:[%s2104 + $0x8] sm:$0xf]
    %v2108 = vld [vmem:[%s2104 + $0xc] sm:$0xf]
    %v2109 = vld [vmem:[%s2104 + $0x10] sm:$0xf]
    %v2110 = vld [vmem:[%s2104 + $0x14] sm:$0xf]
    %v2111 = vld [vmem:[%s2104 + $0x18] sm:$0xf]
    %v2112 = vld [vmem:[%s2104 + $0x1c] sm:$0xf]
    %v2113 = vld [vmem:[%s2104 + $0x20] sm:$0xf]
    %v2114 = vld [vmem:[%s2104 + $0x24] sm:$0xf]
    %v2115 = vld [vmem:[%s2104 + $0x28] sm:$0xf]
    %v2116 = vld [vmem:[%s2104 + $0x2c] sm:$0xf]
    %v2117 = vld [vmem:[%s2104 + $0x30] sm:$0xf]
    %v2118 = vld [vmem:[%s2104 + $0x34] sm:$0xf]
    %v2119 = vld [vmem:[%s2104 + $0x38] sm:$0xf]
    %v2120 = vld [vmem:[%s2104 + $0x3c] sm:$0xf]
    %v2121 = vld [vmem:[%s2104 + $0x40] sm:$0xf]
    %v2122 = vld [vmem:[%s2104 + $0x44] sm:$0xf]
    %v2123 = vld [vmem:[%s2104 + $0x48] sm:$0xf]
    %v2124 = vld [vmem:[%s2104 + $0x4c] sm:$0xf]
    %v2145 = vunpack.c.l.b16 %v2105
    %v2146 = vunpack.c.l.b16 %v2106
    %v2147 = vunpack.c.l.b16 %v2107
    %v2148 = vunpack.c.l.b16 %v2108
    %v2149 = vunpack.c.l.b16 %v2109
    %v2150 = vunpack.c.l.b16 %v2110
    %v2151 = vunpack.c.l.b16 %v2111
    %v2152 = vunpack.c.l.b16 %v2112
    %v2153 = vunpack.c.l.b16 %v2113
    %v2154 = vunpack.c.l.b16 %v2114
    %v2155 = vunpack.c.l.b16 %v2115
    %v2156 = vunpack.c.l.b16 %v2116
    %v2157 = vunpack.c.l.b16 %v2117
    %v2158 = vunpack.c.l.b16 %v2118
    %v2159 = vunpack.c.l.b16 %v2119
    %v2160 = vunpack.c.l.b16 %v2120
    %v2161 = vunpack.c.l.b16 %v2121
    %v2162 = vunpack.c.l.b16 %v2122
    %v2163 = vunpack.c.l.b16 %v2123
    %v2164 = vunpack.c.l.b16 %v2124
    %v2165 = vpack.c.b16 %v2146, %v2145
    %v2166 = vpack.c.b16 %v2148, %v2147
    %v2167 = vpack.c.b16 %v2150, %v2149
    %v2168 = vpack.c.b16 %v2152, %v2151
    %v2169 = vpack.c.b16 %v2154, %v2153
    %v2170 = vpack.c.b16 %v2156, %v2155
    %v2171 = vpack.c.b16 %v2158, %v2157
    %v2172 = vpack.c.b16 %v2160, %v2159
    %v2173 = vpack.c.b16 %v2162, %v2161
    %v2174 = vpack.c.b16 %v2164, %v2163
    %v2186 = vsel %vm1631, %v2103, 0
    %2188 = vmatpush.bf16.msra.mxu0 %v2172
    %2189 = vmatpush.bf16.msra.mxu0 %v2171
    %2190 = vmatpush.bf16.msra.mxu0 %v2170
    %2191 = vmatpush.bf16.msra.mxu0 %v2169
    %2192 = vmatpush.bf16.msra.mxu0 %v2168
    %2193 = vmatpush.bf16.msra.mxu0 %v2167
    %2194 = vmatpush.bf16.msra.mxu0 %v2166
    %2195 = vmatpush.bf16.msra.mxu0 %v2165
    %2196 = vmatmul.bf16.gmra.mxu0 %v2102
    %v2197 = vpop.f32.mrf.mxu0
    %v2198 = vadd.f32 0.0, %v2197
    %v2199 = vpop.f32.mrf.mxu0
    %2200 = vdwg.mxu0
    %2201 = vmatpush.bf16.msra.mxu0 0
    %2202 = vmatpush.bf16.msra.mxu0 0
    %2203 = vmatpush.bf16.msra.mxu0 0
    %2204 = vmatpush.bf16.msra.mxu0 0
    %2205 = vmatpush.bf16.msra.mxu0 0
    %2206 = vmatpush.bf16.msra.mxu0 0
    %2207 = vmatpush.bf16.msra.mxu0 %v2174
    %2208 = vmatpush.bf16.msra.mxu0 %v2173
    %2209 = vmatmul.bf16.gmra.mxu0 %v2186
    %v2210 = vpop.f32.mrf.mxu0
    %v2211 = vadd.f32 %v2198, %v2210
    %v2212 = vpop.f32.mrf.mxu0
    %2213 = vdwg.mxu0
    %v2214 = vadd.f32 %v2059, %v2211
    %v2215 = vld [vmem:[%s8] sm:$0x1]
    %v2217 = vperm.slane %v2215, 0
    %v2219 = vadd.f32 %v2214, %v2217
    %v2220 = vmax.f32 %v2219, 0.0
    %v2221 = vpack.c.bf16 %v2220, %v2220
    %v2222 = vld [vmem:[#allocation8] sm:$0xf]
    %v2223 = vld [vmem:[#allocation8 + $0x4] sm:$0xf]
    %v2224 = vld [vmem:[#allocation8 + $0x8] sm:$0xf]
    %v2225 = vld [vmem:[#allocation8 + $0xc] sm:$0xf]
    %v2226 = vld [vmem:[#allocation8 + $0x10] sm:$0xf]
    %v2227 = vld [vmem:[#allocation8 + $0x14] sm:$0xf]
    %v2228 = vld [vmem:[#allocation8 + $0x18] sm:$0xf]
    %v2229 = vld [vmem:[#allocation8 + $0x1c] sm:$0xf]
    %v2230 = vld [vmem:[#allocation8 + $0x20] sm:$0xf]
    %v2231 = vld [vmem:[#allocation8 + $0x24] sm:$0xf]
    %v2232 = vld [vmem:[#allocation8 + $0x28] sm:$0xf]
    %v2233 = vld [vmem:[#allocation8 + $0x2c] sm:$0xf]
    %v2234 = vld [vmem:[#allocation8 + $0x30] sm:$0xf]
    %v2235 = vld [vmem:[#allocation8 + $0x34] sm:$0xf]
    %v2236 = vld [vmem:[#allocation8 + $0x38] sm:$0xf]
    %v2237 = vld [vmem:[#allocation8 + $0x3c] sm:$0xf]
    %v2238 = vld [vmem:[%s10] sm:$0x1]
    %v2240 = vperm.slane %v2238, 0
    %v2258 = vunpack.c.l.b16 %v2222
    %v2259 = vunpack.c.l.b16 %v2223
    %v2260 = vunpack.c.l.b16 %v2224
    %v2261 = vunpack.c.l.b16 %v2225
    %v2262 = vunpack.c.l.b16 %v2226
    %v2263 = vunpack.c.l.b16 %v2227
    %v2264 = vunpack.c.l.b16 %v2228
    %v2265 = vunpack.c.l.b16 %v2229
    %v2266 = vunpack.c.l.b16 %v2230
    %v2267 = vunpack.c.l.b16 %v2231
    %v2268 = vunpack.c.l.b16 %v2232
    %v2269 = vunpack.c.l.b16 %v2233
    %v2270 = vunpack.c.l.b16 %v2234
    %v2271 = vunpack.c.l.b16 %v2235
    %v2272 = vunpack.c.l.b16 %v2236
    %v2273 = vunpack.c.l.b16 %v2237
    %v2274 = vpack.c.b16 %v2259, %v2258
    %v2275 = vpack.c.b16 %v2261, %v2260
    %v2276 = vpack.c.b16 %v2263, %v2262
    %v2277 = vpack.c.b16 %v2265, %v2264
    %v2278 = vpack.c.b16 %v2267, %v2266
    %v2279 = vpack.c.b16 %v2269, %v2268
    %v2280 = vpack.c.b16 %v2271, %v2270
    %v2281 = vpack.c.b16 %v2273, %v2272
    %2290 = vmatpush.bf16.msra.mxu0 %v2281
    %2291 = vmatpush.bf16.msra.mxu0 %v2280
    %2292 = vmatpush.bf16.msra.mxu0 %v2279
    %2293 = vmatpush.bf16.msra.mxu0 %v2278
    %2294 = vmatpush.bf16.msra.mxu0 %v2277
    %2295 = vmatpush.bf16.msra.mxu0 %v2276
    %2296 = vmatpush.bf16.msra.mxu0 %v2275
    %2297 = vmatpush.bf16.msra.mxu0 %v2274
    %2298 = vmatmul.bf16.gmra.mxu0 %v2221
    %v2299 = vpop.f32.mrf.mxu0
    %v2300 = vadd.f32 %v2240, %v2299
    %v2301 = vpop.f32.mrf.mxu0
    %2302 = vdwg.mxu0
    %v2303 = vmax.f32 %v2300, 0.0
    %v2304 = vpack.c.bf16 %v2303, %v2303
    %v2305 = vld [vmem:[#allocation10] sm:$0xf]
    %v2306 = vld [vmem:[#allocation10 + $0x4] sm:$0xf]
    %v2307 = vld [vmem:[#allocation10 + $0x8] sm:$0xf]
    %v2308 = vld [vmem:[#allocation10 + $0xc] sm:$0xf]
    %v2309 = vld [vmem:[#allocation10 + $0x10] sm:$0xf]
    %v2310 = vld [vmem:[#allocation10 + $0x14] sm:$0xf]
    %v2311 = vld [vmem:[#allocation10 + $0x18] sm:$0xf]
    %v2312 = vld [vmem:[#allocation10 + $0x1c] sm:$0xf]
    %v2313 = vld [vmem:[#allocation10 + $0x20] sm:$0xf]
    %v2314 = vld [vmem:[#allocation10 + $0x24] sm:$0xf]
    %v2315 = vld [vmem:[#allocation10 + $0x28] sm:$0xf]
    %v2316 = vld [vmem:[#allocation10 + $0x2c] sm:$0xf]
    %v2317 = vld [vmem:[#allocation10 + $0x30] sm:$0xf]
    %v2318 = vld [vmem:[#allocation10 + $0x34] sm:$0xf]
    %v2319 = vld [vmem:[#allocation10 + $0x38] sm:$0xf]
    %v2320 = vld [vmem:[#allocation10 + $0x3c] sm:$0xf]
    %v2321 = vld [vmem:[%s12] sm:$0x1]
    %v2323 = vperm.slane %v2321, 0
    %v2341 = vunpack.c.l.b16 %v2305
    %v2342 = vunpack.c.l.b16 %v2306
    %v2343 = vunpack.c.l.b16 %v2307
    %v2344 = vunpack.c.l.b16 %v2308
    %v2345 = vunpack.c.l.b16 %v2309
    %v2346 = vunpack.c.l.b16 %v2310
    %v2347 = vunpack.c.l.b16 %v2311
    %v2348 = vunpack.c.l.b16 %v2312
    %v2349 = vunpack.c.l.b16 %v2313
    %v2350 = vunpack.c.l.b16 %v2314
    %v2351 = vunpack.c.l.b16 %v2315
    %v2352 = vunpack.c.l.b16 %v2316
    %v2353 = vunpack.c.l.b16 %v2317
    %v2354 = vunpack.c.l.b16 %v2318
    %v2355 = vunpack.c.l.b16 %v2319
    %v2356 = vunpack.c.l.b16 %v2320
    %v2357 = vpack.c.b16 %v2342, %v2341
    %v2358 = vpack.c.b16 %v2344, %v2343
    %v2359 = vpack.c.b16 %v2346, %v2345
    %v2360 = vpack.c.b16 %v2348, %v2347
    %v2361 = vpack.c.b16 %v2350, %v2349
    %v2362 = vpack.c.b16 %v2352, %v2351
    %v2363 = vpack.c.b16 %v2354, %v2353
    %v2364 = vpack.c.b16 %v2356, %v2355
    %2373 = vmatpush.bf16.msra.mxu0 %v2364
    %2374 = vmatpush.bf16.msra.mxu0 %v2363
    %2375 = vmatpush.bf16.msra.mxu0 %v2362
    %2376 = vmatpush.bf16.msra.mxu0 %v2361
    %2377 = vmatpush.bf16.msra.mxu0 %v2360
    %2378 = vmatpush.bf16.msra.mxu0 %v2359
    %2379 = vmatpush.bf16.msra.mxu0 %v2358
    %2380 = vmatpush.bf16.msra.mxu0 %v2357
    %2381 = vmatmul.bf16.gmra.mxu0 %v2304
    %v2382 = vpop.f32.mrf.mxu0
    %v2383 = vadd.f32 %v2323, %v2382
    %v2384 = vpop.f32.mrf.mxu0
    %2385 = vdwg.mxu0
    %2386 = vst [vmem:[#allocation11] sm:$0x3] %v2383
    // Predicated region
    $region74: #{tpu_custom_call.1} parent=1 // pred_check
      _
    $region75: #{tpu_custom_call.1} parent=1 // pred_check_branch
      %2388 = sbr.rel (0) target = $region77
    $region76: #{tpu_custom_call.1} parent=1 // pred_region
      %2390 = vsyncadd [#allocation4], 0
      %s2392 = sshll.u32 [#allocation11], 4
      %s2393 = int_to_ptr.vmem [resolvable:$true] %s2392
      %s2394 = sshll.u32 %s13, 4
      %s2395 = int_to_ptr.hbm [resolvable:$true] %s2394
      %2397 = dma.vmem_to_hbm [thread:$0]  %s2393, 32, %s2395, [#allocation4]
    $region77: #{tpu_custom_call.1} parent=1 // pred_fallthru
      _
    // Predicated region
    $region78: #{tpu_custom_call.1} parent=1 // pred_check
      _
    $region79: #{tpu_custom_call.1} parent=1 // pred_check_branch
      %2399 = sbr.rel (0) target = $region81
    $region80: #{tpu_custom_call.1} parent=1 // pred_region
      %2401 = dma.done [#allocation4], 32
    $region81: #{tpu_custom_call.1} parent=1 // pred_fallthru
      _
    %2402 = vsyncpa [#allocation3], 1
    %2403 = vsyncpa [#allocation6], 1
    %2404 = vsyncpa [#allocation9], 1
    %2405 = vsyncpa [#allocation4], 1

</llo_original>
